<compile_context>
chip_gen: v7x
topology: tpu7x:2x2x1
jax: 0.10.0
libtpu: 0.0.40
codegen_flags: <defaults>
</compile_context>

<pallas_src>
import jax
import jax.numpy as jnp
from jax import lax
from jax.experimental import pallas as pl
from jax.experimental.pallas import tpu as pltpu

B_COEF = 1.0      # b in -b * x^f
SUBSTEPS = 4      # RK4 substeps per output interval


def ode_block_forward(x, A, vt):
    """Pallas implementation of ODEBlock.forward.

    x  : (N, D) float32 initial state
    A  : (N, N) float32 adjacency
    vt : (T,)   float32 integration time vector
    returns (T, N, D) trajectory (out[0] == x).
    """
    N, D = x.shape
    T = vt.shape[0]
    vt = vt.astype(x.dtype)  # .type_as(x)

    # Lane-dense working layout + stationary matmul RHS (see header).
    xT = jnp.transpose(x).astype(jnp.float32)   # (D, N)
    At = jnp.transpose(A).astype(jnp.float32)   # (N, N) = A^T

    def kernel(vt_ref, x_ref, At_ref, out_ref, state_ref):
        # Hoist A^T once; reused by all 16 matmuls per output interval.
        A_T = At_ref[...]

        def func(y):
            # y: (D, N).  f = -b*y + (A @ g)^T computed as g @ A^T.
            yh = y * y
            g = yh * pl.reciprocal(yh + 1.0, approx=False)
            return -B_COEF * y + jnp.dot(
                g, A_T, preferred_element_type=jnp.float32
            )

        # t = vt[0]: trajectory starts at the initial state.
        state_ref[...] = x_ref[...]
        out_ref[pl.ds(0, 1)] = x_ref[...][None].astype(out_ref.dtype)

        # Whole time integration inside one grid step: sequential dependence,
        # state stays resident in VMEM, no per-timestep pipeline overhead.
        @pl.loop(1, T)
        def _time_step(i):
            dt = (vt_ref[i] - vt_ref[i - 1]) / SUBSTEPS

            def substep(_, y):
                k1 = func(y)
                k2 = func(y + 0.5 * dt * k1)
                k3 = func(y + 0.5 * dt * k2)
                k4 = func(y + dt * k3)
                return y + (dt / 6.0) * (k1 + 2.0 * k2 + 2.0 * k3 + k4)

            y = lax.fori_loop(0, SUBSTEPS, substep, state_ref[...], unroll=True)
            state_ref[...] = y
            out_ref[pl.ds(i, 1)] = y[None].astype(out_ref.dtype)

    traj_t = pl.pallas_call(
        kernel,
        out_shape=jax.ShapeDtypeStruct((T, D, N), x.dtype),
        grid_spec=pltpu.PrefetchScalarGridSpec(
            num_scalar_prefetch=1,          # vt lands in SMEM
            grid=(1,),                      # single grid step; T-loop in kernel
            in_specs=[
                pl.BlockSpec((D, N), lambda i, vt_s: (0, 0)),   # x^T full block
                pl.BlockSpec((N, N), lambda i, vt_s: (0, 0)),   # A^T full block
            ],
            out_specs=pl.BlockSpec((T, D, N), lambda i, vt_s: (0, 0, 0)),
            scratch_shapes=[pltpu.VMEM((D, N), jnp.float32)],   # running state
        ),
        compiler_params=pltpu.CompilerParams(
            dimension_semantics=("arbitrary",),
        ),
    )(vt, xT, At)

    # Transpose once, outside the kernel: (T, D, N) -> (T, N, D).
    return jnp.transpose(traj_t, (0, 2, 1))


def ode_block_reference(x, A, vt):
    """Plain-JAX reference with identical fixed-step RK4 semantics."""
    def func(y):
        yh = y * y
        return -B_COEF * y + A @ (yh / (yh + 1.0))

    outs = [x]
    y = x
    for i in range(1, vt.shape[0]):
        dt = (vt[i] - vt[i - 1]) / SUBSTEPS
        for _ in range(SUBSTEPS):
            k1 = func(y)
            k2 = func(y + 0.5 * dt * k1)
            k3 = func(y + 0.5 * dt * k2)
            k4 = func(y + dt * k3)
            y = y + (dt / 6.0) * (k1 + 2.0 * k2 + 2.0 * k3 + k4)
        outs.append(y)
    return jnp.stack(outs, axis=0)


if __name__ == "__main__":
    # Small, deterministic problem: N nodes, D-dim state per node, T time ticks.
    N, D, T = 64, 8, 8

    key = jax.random.PRNGKey(0)
    k_adj, k_x = jax.random.split(key)

    # Deterministic "parameters": sparse-ish positive adjacency, b/f/h constants.
    A = (jax.random.uniform(k_adj, (N, N)) < 0.2).astype(jnp.float32) * 0.5
    x0 = jax.random.uniform(k_x, (N, D), minval=0.0, maxval=2.0).astype(jnp.float32)

    vt = jnp.linspace(0.0, 5.0, T).astype(jnp.float32)  # args.data_size = T

    out = ode_block_forward(x0, A, vt)
    out = jax.block_until_ready(out)

    ref = jax.block_until_ready(ode_block_reference(x0, A, vt))

    assert out.shape == (T, N, D), out.shape
    assert jnp.allclose(out, ref, rtol=1e-4, atol=1e-4), (
        float(jnp.max(jnp.abs(out - ref)))
    )

    print("KERNEL_OK")
</pallas_src>

<mosaic_0001>
module attributes {stable_mosaic.version = 11 : i64} {
  func.func @kernel(%arg0: i32, %arg1: memref<8xf32, #tpu.memory_space<smem>>, %arg2: memref<8x64xf32, #tpu.memory_space<vmem>>, %arg3: memref<64x64xf32, #tpu.memory_space<vmem>>, %arg4: memref<8x8x64xf32, #tpu.memory_space<vmem>>, %arg5: memref<8x64xf32, #tpu.memory_space<vmem>>) attributes {dimension_semantics = [#tpu.dimension_semantics<arbitrary>], iteration_bounds = array<i64: 1>, scalar_prefetch = 1 : i64, scratch_operands = 1 : i64, tpu.core_type = #tpu.core_type<tc>, window_params = [{pipeline_mode = #tpu.pipeline_mode<synchronous>, transform_indices = @transform_0, window_bounds = array<i64: 8, 64>}, {pipeline_mode = #tpu.pipeline_mode<synchronous>, transform_indices = @transform_1, window_bounds = array<i64: 64, 64>}, {pipeline_mode = #tpu.pipeline_mode<synchronous>, transform_indices = @transform_2, window_bounds = array<i64: 8, 8, 64>}]} {
    %c0 = arith.constant 0 : index
    %c0_0 = arith.constant 0 : index
    %0 = vector.load %arg3[%c0, %c0_0] : memref<64x64xf32, #tpu.memory_space<vmem>>, vector<64x64xf32>
    %c0_1 = arith.constant 0 : index
    %c0_2 = arith.constant 0 : index
    %1 = vector.load %arg2[%c0_1, %c0_2] : memref<8x64xf32, #tpu.memory_space<vmem>>, vector<8x64xf32>
    %c0_3 = arith.constant 0 : index
    %c0_4 = arith.constant 0 : index
    %2 = vector.load %arg5[%c0_3, %c0_4] : memref<8x64xf32, #tpu.memory_space<vmem>>, vector<8x64xf32>
    tpu.vector_store %arg5[%c0_3, %c0_4], %1 {strides = array<i32>} : memref<8x64xf32, #tpu.memory_space<vmem>>, vector<8x64xf32>,
    %c0_5 = arith.constant 0 : index
    %c0_6 = arith.constant 0 : index
    %3 = vector.load %arg2[%c0_5, %c0_6] : memref<8x64xf32, #tpu.memory_space<vmem>>, vector<8x64xf32>
    %4 = vector.shape_cast %3 : vector<8x64xf32> to vector<1x8x64xf32>
    %c0_7 = arith.constant 0 : index
    %c0_8 = arith.constant 0 : index
    %c0_9 = arith.constant 0 : index
    %5 = vector.load %arg4[%c0_7, %c0_8, %c0_9] : memref<8x8x64xf32, #tpu.memory_space<vmem>>, vector<1x8x64xf32>
    tpu.vector_store %arg4[%c0_7, %c0_8, %c0_9], %4 {strides = array<i32>} : memref<8x8x64xf32, #tpu.memory_space<vmem>>, vector<1x8x64xf32>,
    %c0_i32 = arith.constant 0 : i32
    %c7_i32 = arith.constant 7 : i32
    %6 = arith.addi %c0_i32, %c7_i32 : i32
    %c1_i32 = arith.constant 1 : i32
    scf.for %arg6 = %c0_i32 to %6 step %c1_i32  : i32 {
      %c1_i32_11 = arith.constant 1 : i32
      %7 = arith.muli %arg6, %c1_i32_11 : i32
      %c1_i32_12 = arith.constant 1 : i32
      %8 = arith.addi %c1_i32_12, %7 : i32
      %9 = arith.index_cast %8 : i32 to index
      %10 = memref.load %arg1[%9] : memref<8xf32, #tpu.memory_space<smem>>
      %c1_i32_13 = arith.constant 1 : i32
      %11 = arith.subi %8, %c1_i32_13 : i32
      %12 = arith.index_cast %11 : i32 to index
      %13 = memref.load %arg1[%12] : memref<8xf32, #tpu.memory_space<smem>>
      %14 = arith.subf %10, %13 : f32
      %cst = arith.constant 4.000000e+00 : f32
      %15 = arith.divf %14, %cst : f32
      %c0_14 = arith.constant 0 : index
      %c0_15 = arith.constant 0 : index
      %16 = vector.load %arg5[%c0_14, %c0_15] : memref<8x64xf32, #tpu.memory_space<vmem>>, vector<8x64xf32>
      %c0_i32_16 = arith.constant 0 : i32
      %17 = arith.mulf %16, %16 : vector<8x64xf32>
      %cst_17 = arith.constant 1.000000e+00 : f32
      %18 = vector.broadcast %cst_17 : f32 to vector<8x64xf32>
      %19 = arith.addf %17, %18 : vector<8x64xf32>
      %20 = tpu.reciprocal %19 : vector<8x64xf32> -> vector<8x64xf32>
      %21 = arith.mulf %17, %20 : vector<8x64xf32>
      %cst_18 = arith.constant -1.000000e+00 : f32
      %22 = vector.broadcast %cst_18 : f32 to vector<8x64xf32>
      %23 = arith.mulf %22, %16 : vector<8x64xf32>
      %cst_19 = arith.constant dense<0.000000e+00> : vector<8x64xf32>
      %24 = tpu.matmul %21, %0, %cst_19 {dimension_numbers = #tpu.dot_dimension_numbers<[1], [0], [0], [1], [0, 0, 1, 1], [], []>} : vector<8x64xf32>, vector<64x64xf32>, vector<8x64xf32> -> vector<8x64xf32>
      %25 = arith.addf %23, %24 : vector<8x64xf32>
      %cst_20 = arith.constant 5.000000e-01 : f32
      %26 = arith.mulf %cst_20, %15 : f32
      %27 = vector.broadcast %26 : f32 to vector<8x64xf32>
      %28 = arith.mulf %27, %25 : vector<8x64xf32>
      %29 = arith.addf %16, %28 : vector<8x64xf32>
      %30 = arith.mulf %29, %29 : vector<8x64xf32>
      %cst_21 = arith.constant 1.000000e+00 : f32
      %31 = vector.broadcast %cst_21 : f32 to vector<8x64xf32>
      %32 = arith.addf %30, %31 : vector<8x64xf32>
      %33 = tpu.reciprocal %32 : vector<8x64xf32> -> vector<8x64xf32>
      %34 = arith.mulf %30, %33 : vector<8x64xf32>
      %cst_22 = arith.constant -1.000000e+00 : f32
      %35 = vector.broadcast %cst_22 : f32 to vector<8x64xf32>
      %36 = arith.mulf %35, %29 : vector<8x64xf32>
      %cst_23 = arith.constant dense<0.000000e+00> : vector<8x64xf32>
      %37 = tpu.matmul %34, %0, %cst_23 {dimension_numbers = #tpu.dot_dimension_numbers<[1], [0], [0], [1], [0, 0, 1, 1], [], []>} : vector<8x64xf32>, vector<64x64xf32>, vector<8x64xf32> -> vector<8x64xf32>
      %38 = arith.addf %36, %37 : vector<8x64xf32>
      %cst_24 = arith.constant 5.000000e-01 : f32
      %39 = arith.mulf %cst_24, %15 : f32
      %40 = vector.broadcast %39 : f32 to vector<8x64xf32>
      %41 = arith.mulf %40, %38 : vector<8x64xf32>
      %42 = arith.addf %16, %41 : vector<8x64xf32>
      %43 = arith.mulf %42, %42 : vector<8x64xf32>
      %cst_25 = arith.constant 1.000000e+00 : f32
      %44 = vector.broadcast %cst_25 : f32 to vector<8x64xf32>
      %45 = arith.addf %43, %44 : vector<8x64xf32>
      %46 = tpu.reciprocal %45 : vector<8x64xf32> -> vector<8x64xf32>
      %47 = arith.mulf %43, %46 : vector<8x64xf32>
      %cst_26 = arith.constant -1.000000e+00 : f32
      %48 = vector.broadcast %cst_26 : f32 to vector<8x64xf32>
      %49 = arith.mulf %48, %42 : vector<8x64xf32>
      %cst_27 = arith.constant dense<0.000000e+00> : vector<8x64xf32>
      %50 = tpu.matmul %47, %0, %cst_27 {dimension_numbers = #tpu.dot_dimension_numbers<[1], [0], [0], [1], [0, 0, 1, 1], [], []>} : vector<8x64xf32>, vector<64x64xf32>, vector<8x64xf32> -> vector<8x64xf32>
      %51 = arith.addf %49, %50 : vector<8x64xf32>
      %52 = vector.broadcast %15 : f32 to vector<8x64xf32>
      %53 = arith.mulf %52, %51 : vector<8x64xf32>
      %54 = arith.addf %16, %53 : vector<8x64xf32>
      %55 = arith.mulf %54, %54 : vector<8x64xf32>
      %cst_28 = arith.constant 1.000000e+00 : f32
      %56 = vector.broadcast %cst_28 : f32 to vector<8x64xf32>
      %57 = arith.addf %55, %56 : vector<8x64xf32>
      %58 = tpu.reciprocal %57 : vector<8x64xf32> -> vector<8x64xf32>
      %59 = arith.mulf %55, %58 : vector<8x64xf32>
      %cst_29 = arith.constant -1.000000e+00 : f32
      %60 = vector.broadcast %cst_29 : f32 to vector<8x64xf32>
      %61 = arith.mulf %60, %54 : vector<8x64xf32>
      %cst_30 = arith.constant dense<0.000000e+00> : vector<8x64xf32>
      %62 = tpu.matmul %59, %0, %cst_30 {dimension_numbers = #tpu.dot_dimension_numbers<[1], [0], [0], [1], [0, 0, 1, 1], [], []>} : vector<8x64xf32>, vector<64x64xf32>, vector<8x64xf32> -> vector<8x64xf32>
      %63 = arith.addf %61, %62 : vector<8x64xf32>
      %cst_31 = arith.constant 6.000000e+00 : f32
      %64 = arith.divf %15, %cst_31 : f32
      %cst_32 = arith.constant 2.000000e+00 : f32
      %65 = vector.broadcast %cst_32 : f32 to vector<8x64xf32>
      %66 = arith.mulf %65, %38 : vector<8x64xf32>
      %67 = arith.addf %25, %66 : vector<8x64xf32>
      %cst_33 = arith.constant 2.000000e+00 : f32
      %68 = vector.broadcast %cst_33 : f32 to vector<8x64xf32>
      %69 = arith.mulf %68, %51 : vector<8x64xf32>
      %70 = arith.addf %67, %69 : vector<8x64xf32>
      %71 = arith.addf %70, %63 : vector<8x64xf32>
      %72 = vector.broadcast %64 : f32 to vector<8x64xf32>
      %73 = arith.mulf %72, %71 : vector<8x64xf32>
      %74 = arith.addf %16, %73 : vector<8x64xf32>
      %c1_i32_34 = arith.constant 1 : i32
      %75 = arith.mulf %74, %74 : vector<8x64xf32>
      %cst_35 = arith.constant 1.000000e+00 : f32
      %76 = vector.broadcast %cst_35 : f32 to vector<8x64xf32>
      %77 = arith.addf %75, %76 : vector<8x64xf32>
      %78 = tpu.reciprocal %77 : vector<8x64xf32> -> vector<8x64xf32>
      %79 = arith.mulf %75, %78 : vector<8x64xf32>
      %cst_36 = arith.constant -1.000000e+00 : f32
      %80 = vector.broadcast %cst_36 : f32 to vector<8x64xf32>
      %81 = arith.mulf %80, %74 : vector<8x64xf32>
      %cst_37 = arith.constant dense<0.000000e+00> : vector<8x64xf32>
      %82 = tpu.matmul %79, %0, %cst_37 {dimension_numbers = #tpu.dot_dimension_numbers<[1], [0], [0], [1], [0, 0, 1, 1], [], []>} : vector<8x64xf32>, vector<64x64xf32>, vector<8x64xf32> -> vector<8x64xf32>
      %83 = arith.addf %81, %82 : vector<8x64xf32>
      %cst_38 = arith.constant 5.000000e-01 : f32
      %84 = arith.mulf %cst_38, %15 : f32
      %85 = vector.broadcast %84 : f32 to vector<8x64xf32>
      %86 = arith.mulf %85, %83 : vector<8x64xf32>
      %87 = arith.addf %74, %86 : vector<8x64xf32>
      %88 = arith.mulf %87, %87 : vector<8x64xf32>
      %cst_39 = arith.constant 1.000000e+00 : f32
      %89 = vector.broadcast %cst_39 : f32 to vector<8x64xf32>
      %90 = arith.addf %88, %89 : vector<8x64xf32>
      %91 = tpu.reciprocal %90 : vector<8x64xf32> -> vector<8x64xf32>
      %92 = arith.mulf %88, %91 : vector<8x64xf32>
      %cst_40 = arith.constant -1.000000e+00 : f32
      %93 = vector.broadcast %cst_40 : f32 to vector<8x64xf32>
      %94 = arith.mulf %93, %87 : vector<8x64xf32>
      %cst_41 = arith.constant dense<0.000000e+00> : vector<8x64xf32>
      %95 = tpu.matmul %92, %0, %cst_41 {dimension_numbers = #tpu.dot_dimension_numbers<[1], [0], [0], [1], [0, 0, 1, 1], [], []>} : vector<8x64xf32>, vector<64x64xf32>, vector<8x64xf32> -> vector<8x64xf32>
      %96 = arith.addf %94, %95 : vector<8x64xf32>
      %cst_42 = arith.constant 5.000000e-01 : f32
      %97 = arith.mulf %cst_42, %15 : f32
      %98 = vector.broadcast %97 : f32 to vector<8x64xf32>
      %99 = arith.mulf %98, %96 : vector<8x64xf32>
      %100 = arith.addf %74, %99 : vector<8x64xf32>
      %101 = arith.mulf %100, %100 : vector<8x64xf32>
      %cst_43 = arith.constant 1.000000e+00 : f32
      %102 = vector.broadcast %cst_43 : f32 to vector<8x64xf32>
      %103 = arith.addf %101, %102 : vector<8x64xf32>
      %104 = tpu.reciprocal %103 : vector<8x64xf32> -> vector<8x64xf32>
      %105 = arith.mulf %101, %104 : vector<8x64xf32>
      %cst_44 = arith.constant -1.000000e+00 : f32
      %106 = vector.broadcast %cst_44 : f32 to vector<8x64xf32>
      %107 = arith.mulf %106, %100 : vector<8x64xf32>
      %cst_45 = arith.constant dense<0.000000e+00> : vector<8x64xf32>
      %108 = tpu.matmul %105, %0, %cst_45 {dimension_numbers = #tpu.dot_dimension_numbers<[1], [0], [0], [1], [0, 0, 1, 1], [], []>} : vector<8x64xf32>, vector<64x64xf32>, vector<8x64xf32> -> vector<8x64xf32>
      %109 = arith.addf %107, %108 : vector<8x64xf32>
      %110 = vector.broadcast %15 : f32 to vector<8x64xf32>
      %111 = arith.mulf %110, %109 : vector<8x64xf32>
      %112 = arith.addf %74, %111 : vector<8x64xf32>
      %113 = arith.mulf %112, %112 : vector<8x64xf32>
      %cst_46 = arith.constant 1.000000e+00 : f32
      %114 = vector.broadcast %cst_46 : f32 to vector<8x64xf32>
      %115 = arith.addf %113, %114 : vector<8x64xf32>
      %116 = tpu.reciprocal %115 : vector<8x64xf32> -> vector<8x64xf32>
      %117 = arith.mulf %113, %116 : vector<8x64xf32>
      %cst_47 = arith.constant -1.000000e+00 : f32
      %118 = vector.broadcast %cst_47 : f32 to vector<8x64xf32>
      %119 = arith.mulf %118, %112 : vector<8x64xf32>
      %cst_48 = arith.constant dense<0.000000e+00> : vector<8x64xf32>
      %120 = tpu.matmul %117, %0, %cst_48 {dimension_numbers = #tpu.dot_dimension_numbers<[1], [0], [0], [1], [0, 0, 1, 1], [], []>} : vector<8x64xf32>, vector<64x64xf32>, vector<8x64xf32> -> vector<8x64xf32>
      %121 = arith.addf %119, %120 : vector<8x64xf32>
      %cst_49 = arith.constant 6.000000e+00 : f32
      %122 = arith.divf %15, %cst_49 : f32
      %cst_50 = arith.constant 2.000000e+00 : f32
      %123 = vector.broadcast %cst_50 : f32 to vector<8x64xf32>
      %124 = arith.mulf %123, %96 : vector<8x64xf32>
      %125 = arith.addf %83, %124 : vector<8x64xf32>
      %cst_51 = arith.constant 2.000000e+00 : f32
      %126 = vector.broadcast %cst_51 : f32 to vector<8x64xf32>
      %127 = arith.mulf %126, %109 : vector<8x64xf32>
      %128 = arith.addf %125, %127 : vector<8x64xf32>
      %129 = arith.addf %128, %121 : vector<8x64xf32>
      %130 = vector.broadcast %122 : f32 to vector<8x64xf32>
      %131 = arith.mulf %130, %129 : vector<8x64xf32>
      %132 = arith.addf %74, %131 : vector<8x64xf32>
      %c2_i32 = arith.constant 2 : i32
      %133 = arith.mulf %132, %132 : vector<8x64xf32>
      %cst_52 = arith.constant 1.000000e+00 : f32
      %134 = vector.broadcast %cst_52 : f32 to vector<8x64xf32>
      %135 = arith.addf %133, %134 : vector<8x64xf32>
      %136 = tpu.reciprocal %135 : vector<8x64xf32> -> vector<8x64xf32>
      %137 = arith.mulf %133, %136 : vector<8x64xf32>
      %cst_53 = arith.constant -1.000000e+00 : f32
      %138 = vector.broadcast %cst_53 : f32 to vector<8x64xf32>
      %139 = arith.mulf %138, %132 : vector<8x64xf32>
      %cst_54 = arith.constant dense<0.000000e+00> : vector<8x64xf32>
      %140 = tpu.matmul %137, %0, %cst_54 {dimension_numbers = #tpu.dot_dimension_numbers<[1], [0], [0], [1], [0, 0, 1, 1], [], []>} : vector<8x64xf32>, vector<64x64xf32>, vector<8x64xf32> -> vector<8x64xf32>
      %141 = arith.addf %139, %140 : vector<8x64xf32>
      %cst_55 = arith.constant 5.000000e-01 : f32
      %142 = arith.mulf %cst_55, %15 : f32
      %143 = vector.broadcast %142 : f32 to vector<8x64xf32>
      %144 = arith.mulf %143, %141 : vector<8x64xf32>
      %145 = arith.addf %132, %144 : vector<8x64xf32>
      %146 = arith.mulf %145, %145 : vector<8x64xf32>
      %cst_56 = arith.constant 1.000000e+00 : f32
      %147 = vector.broadcast %cst_56 : f32 to vector<8x64xf32>
      %148 = arith.addf %146, %147 : vector<8x64xf32>
      %149 = tpu.reciprocal %148 : vector<8x64xf32> -> vector<8x64xf32>
      %150 = arith.mulf %146, %149 : vector<8x64xf32>
      %cst_57 = arith.constant -1.000000e+00 : f32
      %151 = vector.broadcast %cst_57 : f32 to vector<8x64xf32>
      %152 = arith.mulf %151, %145 : vector<8x64xf32>
      %cst_58 = arith.constant dense<0.000000e+00> : vector<8x64xf32>
      %153 = tpu.matmul %150, %0, %cst_58 {dimension_numbers = #tpu.dot_dimension_numbers<[1], [0], [0], [1], [0, 0, 1, 1], [], []>} : vector<8x64xf32>, vector<64x64xf32>, vector<8x64xf32> -> vector<8x64xf32>
      %154 = arith.addf %152, %153 : vector<8x64xf32>
      %cst_59 = arith.constant 5.000000e-01 : f32
      %155 = arith.mulf %cst_59, %15 : f32
      %156 = vector.broadcast %155 : f32 to vector<8x64xf32>
      %157 = arith.mulf %156, %154 : vector<8x64xf32>
      %158 = arith.addf %132, %157 : vector<8x64xf32>
      %159 = arith.mulf %158, %158 : vector<8x64xf32>
      %cst_60 = arith.constant 1.000000e+00 : f32
      %160 = vector.broadcast %cst_60 : f32 to vector<8x64xf32>
      %161 = arith.addf %159, %160 : vector<8x64xf32>
      %162 = tpu.reciprocal %161 : vector<8x64xf32> -> vector<8x64xf32>
      %163 = arith.mulf %159, %162 : vector<8x64xf32>
      %cst_61 = arith.constant -1.000000e+00 : f32
      %164 = vector.broadcast %cst_61 : f32 to vector<8x64xf32>
      %165 = arith.mulf %164, %158 : vector<8x64xf32>
      %cst_62 = arith.constant dense<0.000000e+00> : vector<8x64xf32>
      %166 = tpu.matmul %163, %0, %cst_62 {dimension_numbers = #tpu.dot_dimension_numbers<[1], [0], [0], [1], [0, 0, 1, 1], [], []>} : vector<8x64xf32>, vector<64x64xf32>, vector<8x64xf32> -> vector<8x64xf32>
      %167 = arith.addf %165, %166 : vector<8x64xf32>
      %168 = vector.broadcast %15 : f32 to vector<8x64xf32>
      %169 = arith.mulf %168, %167 : vector<8x64xf32>
      %170 = arith.addf %132, %169 : vector<8x64xf32>
      %171 = arith.mulf %170, %170 : vector<8x64xf32>
      %cst_63 = arith.constant 1.000000e+00 : f32
      %172 = vector.broadcast %cst_63 : f32 to vector<8x64xf32>
      %173 = arith.addf %171, %172 : vector<8x64xf32>
      %174 = tpu.reciprocal %173 : vector<8x64xf32> -> vector<8x64xf32>
      %175 = arith.mulf %171, %174 : vector<8x64xf32>
      %cst_64 = arith.constant -1.000000e+00 : f32
      %176 = vector.broadcast %cst_64 : f32 to vector<8x64xf32>
      %177 = arith.mulf %176, %170 : vector<8x64xf32>
      %cst_65 = arith.constant dense<0.000000e+00> : vector<8x64xf32>
      %178 = tpu.matmul %175, %0, %cst_65 {dimension_numbers = #tpu.dot_dimension_numbers<[1], [0], [0], [1], [0, 0, 1, 1], [], []>} : vector<8x64xf32>, vector<64x64xf32>, vector<8x64xf32> -> vector<8x64xf32>
      %179 = arith.addf %177, %178 : vector<8x64xf32>
      %cst_66 = arith.constant 6.000000e+00 : f32
      %180 = arith.divf %15, %cst_66 : f32
      %cst_67 = arith.constant 2.000000e+00 : f32
      %181 = vector.broadcast %cst_67 : f32 to vector<8x64xf32>
      %182 = arith.mulf %181, %154 : vector<8x64xf32>
      %183 = arith.addf %141, %182 : vector<8x64xf32>
      %cst_68 = arith.constant 2.000000e+00 : f32
      %184 = vector.broadcast %cst_68 : f32 to vector<8x64xf32>
      %185 = arith.mulf %184, %167 : vector<8x64xf32>
      %186 = arith.addf %183, %185 : vector<8x64xf32>
      %187 = arith.addf %186, %179 : vector<8x64xf32>
      %188 = vector.broadcast %180 : f32 to vector<8x64xf32>
      %189 = arith.mulf %188, %187 : vector<8x64xf32>
      %190 = arith.addf %132, %189 : vector<8x64xf32>
      %c3_i32 = arith.constant 3 : i32
      %191 = arith.mulf %190, %190 : vector<8x64xf32>
      %cst_69 = arith.constant 1.000000e+00 : f32
      %192 = vector.broadcast %cst_69 : f32 to vector<8x64xf32>
      %193 = arith.addf %191, %192 : vector<8x64xf32>
      %194 = tpu.reciprocal %193 : vector<8x64xf32> -> vector<8x64xf32>
      %195 = arith.mulf %191, %194 : vector<8x64xf32>
      %cst_70 = arith.constant -1.000000e+00 : f32
      %196 = vector.broadcast %cst_70 : f32 to vector<8x64xf32>
      %197 = arith.mulf %196, %190 : vector<8x64xf32>
      %cst_71 = arith.constant dense<0.000000e+00> : vector<8x64xf32>
      %198 = tpu.matmul %195, %0, %cst_71 {dimension_numbers = #tpu.dot_dimension_numbers<[1], [0], [0], [1], [0, 0, 1, 1], [], []>} : vector<8x64xf32>, vector<64x64xf32>, vector<8x64xf32> -> vector<8x64xf32>
      %199 = arith.addf %197, %198 : vector<8x64xf32>
      %cst_72 = arith.constant 5.000000e-01 : f32
      %200 = arith.mulf %cst_72, %15 : f32
      %201 = vector.broadcast %200 : f32 to vector<8x64xf32>
      %202 = arith.mulf %201, %199 : vector<8x64xf32>
      %203 = arith.addf %190, %202 : vector<8x64xf32>
      %204 = arith.mulf %203, %203 : vector<8x64xf32>
      %cst_73 = arith.constant 1.000000e+00 : f32
      %205 = vector.broadcast %cst_73 : f32 to vector<8x64xf32>
      %206 = arith.addf %204, %205 : vector<8x64xf32>
      %207 = tpu.reciprocal %206 : vector<8x64xf32> -> vector<8x64xf32>
      %208 = arith.mulf %204, %207 : vector<8x64xf32>
      %cst_74 = arith.constant -1.000000e+00 : f32
      %209 = vector.broadcast %cst_74 : f32 to vector<8x64xf32>
      %210 = arith.mulf %209, %203 : vector<8x64xf32>
      %cst_75 = arith.constant dense<0.000000e+00> : vector<8x64xf32>
      %211 = tpu.matmul %208, %0, %cst_75 {dimension_numbers = #tpu.dot_dimension_numbers<[1], [0], [0], [1], [0, 0, 1, 1], [], []>} : vector<8x64xf32>, vector<64x64xf32>, vector<8x64xf32> -> vector<8x64xf32>
      %212 = arith.addf %210, %211 : vector<8x64xf32>
      %cst_76 = arith.constant 5.000000e-01 : f32
      %213 = arith.mulf %cst_76, %15 : f32
      %214 = vector.broadcast %213 : f32 to vector<8x64xf32>
      %215 = arith.mulf %214, %212 : vector<8x64xf32>
      %216 = arith.addf %190, %215 : vector<8x64xf32>
      %217 = arith.mulf %216, %216 : vector<8x64xf32>
      %cst_77 = arith.constant 1.000000e+00 : f32
      %218 = vector.broadcast %cst_77 : f32 to vector<8x64xf32>
      %219 = arith.addf %217, %218 : vector<8x64xf32>
      %220 = tpu.reciprocal %219 : vector<8x64xf32> -> vector<8x64xf32>
      %221 = arith.mulf %217, %220 : vector<8x64xf32>
      %cst_78 = arith.constant -1.000000e+00 : f32
      %222 = vector.broadcast %cst_78 : f32 to vector<8x64xf32>
      %223 = arith.mulf %222, %216 : vector<8x64xf32>
      %cst_79 = arith.constant dense<0.000000e+00> : vector<8x64xf32>
      %224 = tpu.matmul %221, %0, %cst_79 {dimension_numbers = #tpu.dot_dimension_numbers<[1], [0], [0], [1], [0, 0, 1, 1], [], []>} : vector<8x64xf32>, vector<64x64xf32>, vector<8x64xf32> -> vector<8x64xf32>
      %225 = arith.addf %223, %224 : vector<8x64xf32>
      %226 = vector.broadcast %15 : f32 to vector<8x64xf32>
      %227 = arith.mulf %226, %225 : vector<8x64xf32>
      %228 = arith.addf %190, %227 : vector<8x64xf32>
      %229 = arith.mulf %228, %228 : vector<8x64xf32>
      %cst_80 = arith.constant 1.000000e+00 : f32
      %230 = vector.broadcast %cst_80 : f32 to vector<8x64xf32>
      %231 = arith.addf %229, %230 : vector<8x64xf32>
      %232 = tpu.reciprocal %231 : vector<8x64xf32> -> vector<8x64xf32>
      %233 = arith.mulf %229, %232 : vector<8x64xf32>
      %cst_81 = arith.constant -1.000000e+00 : f32
      %234 = vector.broadcast %cst_81 : f32 to vector<8x64xf32>
      %235 = arith.mulf %234, %228 : vector<8x64xf32>
      %cst_82 = arith.constant dense<0.000000e+00> : vector<8x64xf32>
      %236 = tpu.matmul %233, %0, %cst_82 {dimension_numbers = #tpu.dot_dimension_numbers<[1], [0], [0], [1], [0, 0, 1, 1], [], []>} : vector<8x64xf32>, vector<64x64xf32>, vector<8x64xf32> -> vector<8x64xf32>
      %237 = arith.addf %235, %236 : vector<8x64xf32>
      %cst_83 = arith.constant 6.000000e+00 : f32
      %238 = arith.divf %15, %cst_83 : f32
      %cst_84 = arith.constant 2.000000e+00 : f32
      %239 = vector.broadcast %cst_84 : f32 to vector<8x64xf32>
      %240 = arith.mulf %239, %212 : vector<8x64xf32>
      %241 = arith.addf %199, %240 : vector<8x64xf32>
      %cst_85 = arith.constant 2.000000e+00 : f32
      %242 = vector.broadcast %cst_85 : f32 to vector<8x64xf32>
      %243 = arith.mulf %242, %225 : vector<8x64xf32>
      %244 = arith.addf %241, %243 : vector<8x64xf32>
      %245 = arith.addf %244, %237 : vector<8x64xf32>
      %246 = vector.broadcast %238 : f32 to vector<8x64xf32>
      %247 = arith.mulf %246, %245 : vector<8x64xf32>
      %248 = arith.addf %190, %247 : vector<8x64xf32>
      %c0_86 = arith.constant 0 : index
      %c0_87 = arith.constant 0 : index
      %249 = vector.load %arg5[%c0_86, %c0_87] : memref<8x64xf32, #tpu.memory_space<vmem>>, vector<8x64xf32>
      tpu.vector_store %arg5[%c0_86, %c0_87], %248 {strides = array<i32>} : memref<8x64xf32, #tpu.memory_space<vmem>>, vector<8x64xf32>,
      %250 = vector.shape_cast %248 : vector<8x64xf32> to vector<1x8x64xf32>
      %251 = arith.index_cast %8 : i32 to index
      %c0_88 = arith.constant 0 : index
      %c0_89 = arith.constant 0 : index
      %252 = vector.load %arg4[%251, %c0_88, %c0_89] : memref<8x8x64xf32, #tpu.memory_space<vmem>>, vector<1x8x64xf32>
      tpu.vector_store %arg4[%251, %c0_88, %c0_89], %250 {strides = array<i32>} : memref<8x8x64xf32, #tpu.memory_space<vmem>>, vector<1x8x64xf32>,
    }
    %c7_i32_10 = arith.constant 7 : i32
    return
  }
  func.func @transform_0(%arg0: i32, %arg1: memref<8xf32, #tpu.memory_space<smem>>) -> (i32, i32) {
    %c0_i32 = arith.constant 0 : i32
    %c0_i32_0 = arith.constant 0 : i32
    %c0_i32_1 = arith.constant 0 : i32
    return %c0_i32, %c0_i32_0 : i32, i32
  }
  func.func @transform_1(%arg0: i32, %arg1: memref<8xf32, #tpu.memory_space<smem>>) -> (i32, i32) {
    %c0_i32 = arith.constant 0 : i32
    %c0_i32_0 = arith.constant 0 : i32
    %c0_i32_1 = arith.constant 0 : i32
    return %c0_i32, %c0_i32_0 : i32, i32
  }
  func.func @transform_2(%arg0: i32, %arg1: memref<8xf32, #tpu.memory_space<smem>>) -> (i32, i32, i32) {
    %c0_i32 = arith.constant 0 : i32
    %c0_i32_0 = arith.constant 0 : i32
    %c0_i32_1 = arith.constant 0 : i32
    %c0_i32_2 = arith.constant 0 : i32
    return %c0_i32, %c0_i32_0, %c0_i32_1 : i32, i32, i32
  }
}

</mosaic_0001>

<llo_original>
// kernel: tpu_custom_call.1
$region0: #{tpu_custom_call.1}
  #allocation0 [shape = 'u32[]', space=smem, size = 0x4, offset = 0x4, fixed_abs, tag = 'smem constant byte address 0x4 - core index']
  #allocation1 [shape = 'u32[144,128]{1,0:T(1,128)}', space=vmem, size = 0x12000, scoped, tag = 'internal scratch']
  #allocation2 [shape = 'f32[8,64]{1,0:T(8,128)}', space=vmem, size = 0x1000, scoped, tag = 'scratch operand']
  #allocation3 [shape = 's32[1]{0}', space=sflag, size = 0x4, scoped, tag = 'scoped memory for tpu_custom_call.1']
  #allocation4 [shape = 'u8[512]{0}', space=smem, size = 0x200, scoped, tag = 'prefetched SMEM operand 0']
  %s0 = inlined_call_operand.hbm [shape: f32[8], index: 0, kind: input, shape index: {}]
  %s1 = inlined_call_operand.hbm [shape: f32[8,64], index: 1, kind: input, shape index: {}]
  %s2 = inlined_call_operand.hbm [shape: f32[64,64], index: 2, kind: input, shape index: {}]
  %s3 = inlined_call_operand.hbm [shape: f32[8,8,64], index: 3, kind: output, shape index: {}]
  %s4 = sld [smem:[#allocation0]]
  $region33: #{tpu_custom_call.1} parent=0
    _
  %s6 = ssub.s32 1, %s4
  %s7 = scalar_select 0, %s6, %s4
  %9 = dma.hbm_to_smem %s0, 16, [#allocation4], [#allocation3]
  %10 = dma.done [#allocation3], 16
  %11 = sfence
  $region1: #{tpu_custom_call.1} parent=0
    #allocation5 [shape = 'u8[4096]{0}', space=vmem, size = 0x1000, scoped, tag = 'input window, operand 1, single buffered']
    #allocation6 [shape = 's32[1]{0}', space=sflag, size = 0x4, scoped, tag = 'scoped memory for tpu_custom_call.1']
    #allocation7 [shape = 's32[1]{0}', space=sflag, size = 0x4, scoped, tag = 'scoped memory for tpu_custom_call.1']
    #allocation8 [shape = 'u8[32768]{0}', space=vmem, size = 0x8000, scoped, tag = 'input window, operand 2, single buffered']
    #allocation9 [shape = 's32[1]{0}', space=sflag, size = 0x4, scoped, tag = 'scoped memory for tpu_custom_call.1']
    #allocation10 [shape = 'u8[32768]{0}', space=vmem, size = 0x8000, scoped, tag = 'output window, operand 0, single buffered']
    %12 = vsyncpa [#allocation6], 0
    %13 = vsyncpa [#allocation9], 0
    %14 = vsyncpa [#allocation7], 0
    // Predicated region
    $region2: #{tpu_custom_call.1} parent=1 // pred_check
      _
    $region3: #{tpu_custom_call.1} parent=1 // pred_check_branch
      %16 = sbr.rel (0) target = $region5
    $region4: #{tpu_custom_call.1} parent=1 // pred_region
      %s18 = ssub.s32 128, 128
      %19 = vsyncadd [#allocation6], %s18
      %s21 = sshll.u32 [#allocation5], 4
      %s22 = int_to_ptr.vmem [resolvable:$true] %s21
      %24 = dma.hbm_to_vmem [thread:$0]  %s1, 128, %s22, [#allocation6]
    $region5: #{tpu_custom_call.1} parent=1 // pred_fallthru
      _
    // Predicated region
    $region6: #{tpu_custom_call.1} parent=1 // pred_check
      _
    $region7: #{tpu_custom_call.1} parent=1 // pred_check_branch
      %26 = sbr.rel (0) target = $region9
    $region8: #{tpu_custom_call.1} parent=1 // pred_region
      %s28 = ssub.s32 1024, 1024
      %29 = vsyncadd [#allocation9], %s28
      %s30 = sshll.u32 [#allocation8], 4
      %s31 = int_to_ptr.vmem [resolvable:$true] %s30
      %36 = dma.hbm_to_vmem [thread:$0]  %s2, 1024, %s31, [#allocation9], 128, 128, 8
    $region9: #{tpu_custom_call.1} parent=1 // pred_fallthru
      _
    // Predicated region
    $region10: #{tpu_custom_call.1} parent=1 // pred_check
      _
    $region11: #{tpu_custom_call.1} parent=1 // pred_check_branch
      %38 = sbr.rel (0) target = $region13
    $region12: #{tpu_custom_call.1} parent=1 // pred_region
      %39 = dma.done [#allocation6], 128
    $region13: #{tpu_custom_call.1} parent=1 // pred_fallthru
      _
    // Predicated region
    $region14: #{tpu_custom_call.1} parent=1 // pred_check
      _
    $region15: #{tpu_custom_call.1} parent=1 // pred_check_branch
      %41 = sbr.rel (0) target = $region17
    $region16: #{tpu_custom_call.1} parent=1 // pred_region
      %42 = dma.done [#allocation9], 1024
    $region17: #{tpu_custom_call.1} parent=1 // pred_fallthru
      _
    %v43 = vld [vmem:[#allocation8] sm:$0xff]
    %v44 = vld [vmem:[#allocation8 + $0x8] sm:$0xff]
    %v45 = vld [vmem:[#allocation8 + $0x10] sm:$0xff]
    %v46 = vld [vmem:[#allocation8 + $0x18] sm:$0xff]
    %v47 = vld [vmem:[#allocation8 + $0x20] sm:$0xff]
    %v48 = vld [vmem:[#allocation8 + $0x28] sm:$0xff]
    %v49 = vld [vmem:[#allocation8 + $0x30] sm:$0xff]
    %v50 = vld [vmem:[#allocation8 + $0x38] sm:$0xff]
    %v51 = vld [vmem:[#allocation5] sm:$0xff]
    %vm52 = vcmask 523264
    %53 = vst.msk [vmem:[#allocation2] sm:$0xff] %vm52, %v51
    %v54 = vld [vmem:[#allocation5] sm:$0xff]
    %55 = vst.msk [vmem:[#allocation10] sm:$0xff] %vm52, %v54
    loop: start=0, step=1, limit=7
    $region18: #{tpu_custom_call.1} parent=1 // loop_pre_header
      _
    $region19: #{tpu_custom_call.1} parent=1 // loop_header
      %s57 = sphi 0, %s61
      %p58 = scmp.ge.s32.totalorder %s57, 7
    $region20: #{tpu_custom_call.1} parent=1 // loop_header_branch
      %60 = sbr.rel (%p58) target = $region24
    $region21: #{tpu_custom_call.1} parent=1 // loop_body
      %s62 = sadd.s32 %s57, 1
      %s63 = sld [smem:[#allocation4 + %s62]]
      %s64 = sld [smem:[#allocation4 + %s57]]
      %s65 = ssub.f32 %s63, %s64
      %v66 = vrcp.pop 4.0
      %s67 = vtos %v66
      %s68 = smul.f32 %s65, %s67
      %v69 = vld [vmem:[#allocation2] sm:$0xff]
      %v70 = vmul.f32 %v69, %v69
      %v71 = vadd.f32 %v70, 1.0
      %v72 = vrcp.pop %v71
      %v73 = vmul.f32 %v70, %v72
      %v74 = vmul.f32 %v69, -1.0
      %v76 = vsel %vm52, %v73, 0
      %78 = vmatprep.subr.mxu0 0.0
      %79 = vmatpush1.msra.mxu0 %v43
      %80 = vmatprep.subr.mxu0 0.0
      %81 = vmatpush1.msra.mxu0 %v44
      %82 = vmatprep.subr.mxu0 0.0
      %83 = vmatpush1.msra.mxu0 %v45
      %84 = vmatprep.subr.mxu0 0.0
      %85 = vmatpush1.msra.mxu0 %v46
      %86 = vmatprep.subr.mxu0 0.0
      %87 = vmatpush1.msra.mxu0 %v47
      %88 = vmatprep.subr.mxu0 0.0
      %89 = vmatpush1.msra.mxu0 %v48
      %90 = vmatprep.subr.mxu0 0.0
      %91 = vmatpush1.msra.mxu0 %v49
      %92 = vmatprep.subr.mxu0 0.0
      %93 = vmatpush1.msra.mxu0 %v50
      %94 = vmatprep.subr.mxu0 0.0
      %95 = vmatpush1.msra.mxu0 0.0
      %96 = vmatprep.subr.mxu0 0.0
      %97 = vmatpush1.msra.mxu0 0.0
      %98 = vmatprep.subr.mxu0 0.0
      %99 = vmatpush1.msra.mxu0 0.0
      %100 = vmatprep.subr.mxu0 0.0
      %101 = vmatpush1.msra.mxu0 0.0
      %102 = vmatprep.subr.mxu0 0.0
      %103 = vmatpush1.msra.mxu0 0.0
      %104 = vmatprep.subr.mxu0 0.0
      %105 = vmatpush1.msra.mxu0 0.0
      %106 = vmatprep.subr.mxu0 0.0
      %107 = vmatpush1.msra.mxu0 0.0
      %108 = vmatprep.subr.mxu0 0.0
      %109 = vmatpush1.msra.mxu0 0.0
      %110 = vmatprep.subr.mxu0 0.0
      %111 = vmatpush1.msra.mxu0 0.0
      %112 = vmatprep.subr.mxu0 0.0
      %113 = vmatpush1.msra.mxu0 0.0
      %114 = vmatprep.subr.mxu0 0.0
      %115 = vmatpush1.msra.mxu0 0.0
      %116 = vmatprep.subr.mxu0 0.0
      %117 = vmatpush1.msra.mxu0 0.0
      %118 = vmatprep.subr.mxu0 0.0
      %119 = vmatpush1.msra.mxu0 0.0
      %120 = vmatprep.subr.mxu0 0.0
      %121 = vmatpush1.msra.mxu0 0.0
      %122 = vmatprep.subr.mxu0 0.0
      %123 = vmatpush1.msra.mxu0 0.0
      %124 = vmatprep.subr.mxu0 0.0
      %125 = vmatpush1.msra.mxu0 0.0
      %126 = vmatprep.subr.mxu0 0.0
      %127 = vmatpush1.msra.mxu0 0.0
      %128 = vmatprep.subr.mxu0 0.0
      %129 = vmatpush1.msra.mxu0 0.0
      %130 = vmatprep.subr.mxu0 0.0
      %131 = vmatpush1.msra.mxu0 0.0
      %132 = vmatprep.subr.mxu0 0.0
      %133 = vmatpush1.msra.mxu0 0.0
      %134 = vmatprep.subr.mxu0 0.0
      %135 = vmatpush1.msra.mxu0 0.0
      %136 = vmatprep.subr.mxu0 0.0
      %137 = vmatpush1.msra.mxu0 0.0
      %138 = vmatprep.subr.mxu0 0.0
      %139 = vmatpush1.msra.mxu0 0.0
      %140 = vmatprep.subr.mxu0 0.0
      %141 = vmatpush1.msra.mxu0 0.0
      %142 = vmatprep.mubr.f32.mxu0 0.0
      %143 = vmatmul.mubr.f32.gmra.mrb[0].mxu0 %v76
      %v144 = vpop.f32.mrb[0].mxu0
      %v145 = vadd.f32 0.0, %v144
      %v146 = vpop.f32.mrb[0].mxu0
      %147 = vdwg.mxu0
      %v148 = vadd.f32 %v74, %v145
      %s149 = smul.f32 %s68, 0.5
      %v150 = vstv %s149
      %v151 = vmul.f32 %v150, %v148
      %v152 = vadd.f32 %v69, %v151
      %v153 = vmul.f32 %v152, %v152
      %v154 = vadd.f32 %v153, 1.0
      %v155 = vrcp.pop %v154
      %v156 = vmul.f32 %v153, %v155
      %v157 = vmul.f32 %v152, -1.0
      %v159 = vsel %vm52, %v156, 0
      %161 = vmatprep.subr.mxu0 0.0
      %162 = vmatpush1.msra.mxu0 %v43
      %163 = vmatprep.subr.mxu0 0.0
      %164 = vmatpush1.msra.mxu0 %v44
      %165 = vmatprep.subr.mxu0 0.0
      %166 = vmatpush1.msra.mxu0 %v45
      %167 = vmatprep.subr.mxu0 0.0
      %168 = vmatpush1.msra.mxu0 %v46
      %169 = vmatprep.subr.mxu0 0.0
      %170 = vmatpush1.msra.mxu0 %v47
      %171 = vmatprep.subr.mxu0 0.0
      %172 = vmatpush1.msra.mxu0 %v48
      %173 = vmatprep.subr.mxu0 0.0
      %174 = vmatpush1.msra.mxu0 %v49
      %175 = vmatprep.subr.mxu0 0.0
      %176 = vmatpush1.msra.mxu0 %v50
      %177 = vmatprep.subr.mxu0 0.0
      %178 = vmatpush1.msra.mxu0 0.0
      %179 = vmatprep.subr.mxu0 0.0
      %180 = vmatpush1.msra.mxu0 0.0
      %181 = vmatprep.subr.mxu0 0.0
      %182 = vmatpush1.msra.mxu0 0.0
      %183 = vmatprep.subr.mxu0 0.0
      %184 = vmatpush1.msra.mxu0 0.0
      %185 = vmatprep.subr.mxu0 0.0
      %186 = vmatpush1.msra.mxu0 0.0
      %187 = vmatprep.subr.mxu0 0.0
      %188 = vmatpush1.msra.mxu0 0.0
      %189 = vmatprep.subr.mxu0 0.0
      %190 = vmatpush1.msra.mxu0 0.0
      %191 = vmatprep.subr.mxu0 0.0
      %192 = vmatpush1.msra.mxu0 0.0
      %193 = vmatprep.subr.mxu0 0.0
      %194 = vmatpush1.msra.mxu0 0.0
      %195 = vmatprep.subr.mxu0 0.0
      %196 = vmatpush1.msra.mxu0 0.0
      %197 = vmatprep.subr.mxu0 0.0
      %198 = vmatpush1.msra.mxu0 0.0
      %199 = vmatprep.subr.mxu0 0.0
      %200 = vmatpush1.msra.mxu0 0.0
      %201 = vmatprep.subr.mxu0 0.0
      %202 = vmatpush1.msra.mxu0 0.0
      %203 = vmatprep.subr.mxu0 0.0
      %204 = vmatpush1.msra.mxu0 0.0
      %205 = vmatprep.subr.mxu0 0.0
      %206 = vmatpush1.msra.mxu0 0.0
      %207 = vmatprep.subr.mxu0 0.0
      %208 = vmatpush1.msra.mxu0 0.0
      %209 = vmatprep.subr.mxu0 0.0
      %210 = vmatpush1.msra.mxu0 0.0
      %211 = vmatprep.subr.mxu0 0.0
      %212 = vmatpush1.msra.mxu0 0.0
      %213 = vmatprep.subr.mxu0 0.0
      %214 = vmatpush1.msra.mxu0 0.0
      %215 = vmatprep.subr.mxu0 0.0
      %216 = vmatpush1.msra.mxu0 0.0
      %217 = vmatprep.subr.mxu0 0.0
      %218 = vmatpush1.msra.mxu0 0.0
      %219 = vmatprep.subr.mxu0 0.0
      %220 = vmatpush1.msra.mxu0 0.0
      %221 = vmatprep.subr.mxu0 0.0
      %222 = vmatpush1.msra.mxu0 0.0
      %223 = vmatprep.subr.mxu0 0.0
      %224 = vmatpush1.msra.mxu0 0.0
      %225 = vmatprep.mubr.f32.mxu0 0.0
      %226 = vmatmul.mubr.f32.gmra.mrb[0].mxu0 %v159
      %v227 = vpop.f32.mrb[0].mxu0
      %v228 = vadd.f32 0.0, %v227
      %v229 = vpop.f32.mrb[0].mxu0
      %230 = vdwg.mxu0
      %v231 = vadd.f32 %v157, %v228
      %v232 = vmul.f32 %v150, %v231
      %v233 = vadd.f32 %v69, %v232
      %v234 = vmul.f32 %v233, %v233
      %v235 = vadd.f32 %v234, 1.0
      %v236 = vrcp.pop %v235
      %v237 = vmul.f32 %v234, %v236
      %v238 = vmul.f32 %v233, -1.0
      %v240 = vsel %vm52, %v237, 0
      %242 = vmatprep.subr.mxu0 0.0
      %243 = vmatpush1.msra.mxu0 %v43
      %244 = vmatprep.subr.mxu0 0.0
      %245 = vmatpush1.msra.mxu0 %v44
      %246 = vmatprep.subr.mxu0 0.0
      %247 = vmatpush1.msra.mxu0 %v45
      %248 = vmatprep.subr.mxu0 0.0
      %249 = vmatpush1.msra.mxu0 %v46
      %250 = vmatprep.subr.mxu0 0.0
      %251 = vmatpush1.msra.mxu0 %v47
      %252 = vmatprep.subr.mxu0 0.0
      %253 = vmatpush1.msra.mxu0 %v48
      %254 = vmatprep.subr.mxu0 0.0
      %255 = vmatpush1.msra.mxu0 %v49
      %256 = vmatprep.subr.mxu0 0.0
      %257 = vmatpush1.msra.mxu0 %v50
      %258 = vmatprep.subr.mxu0 0.0
      %259 = vmatpush1.msra.mxu0 0.0
      %260 = vmatprep.subr.mxu0 0.0
      %261 = vmatpush1.msra.mxu0 0.0
      %262 = vmatprep.subr.mxu0 0.0
      %263 = vmatpush1.msra.mxu0 0.0
      %264 = vmatprep.subr.mxu0 0.0
      %265 = vmatpush1.msra.mxu0 0.0
      %266 = vmatprep.subr.mxu0 0.0
      %267 = vmatpush1.msra.mxu0 0.0
      %268 = vmatprep.subr.mxu0 0.0
      %269 = vmatpush1.msra.mxu0 0.0
      %270 = vmatprep.subr.mxu0 0.0
      %271 = vmatpush1.msra.mxu0 0.0
      %272 = vmatprep.subr.mxu0 0.0
      %273 = vmatpush1.msra.mxu0 0.0
      %274 = vmatprep.subr.mxu0 0.0
      %275 = vmatpush1.msra.mxu0 0.0
      %276 = vmatprep.subr.mxu0 0.0
      %277 = vmatpush1.msra.mxu0 0.0
      %278 = vmatprep.subr.mxu0 0.0
      %279 = vmatpush1.msra.mxu0 0.0
      %280 = vmatprep.subr.mxu0 0.0
      %281 = vmatpush1.msra.mxu0 0.0
      %282 = vmatprep.subr.mxu0 0.0
      %283 = vmatpush1.msra.mxu0 0.0
      %284 = vmatprep.subr.mxu0 0.0
      %285 = vmatpush1.msra.mxu0 0.0
      %286 = vmatprep.subr.mxu0 0.0
      %287 = vmatpush1.msra.mxu0 0.0
      %288 = vmatprep.subr.mxu0 0.0
      %289 = vmatpush1.msra.mxu0 0.0
      %290 = vmatprep.subr.mxu0 0.0
      %291 = vmatpush1.msra.mxu0 0.0
      %292 = vmatprep.subr.mxu0 0.0
      %293 = vmatpush1.msra.mxu0 0.0
      %294 = vmatprep.subr.mxu0 0.0
      %295 = vmatpush1.msra.mxu0 0.0
      %296 = vmatprep.subr.mxu0 0.0
      %297 = vmatpush1.msra.mxu0 0.0
      %298 = vmatprep.subr.mxu0 0.0
      %299 = vmatpush1.msra.mxu0 0.0
      %300 = vmatprep.subr.mxu0 0.0
      %301 = vmatpush1.msra.mxu0 0.0
      %302 = vmatprep.subr.mxu0 0.0
      %303 = vmatpush1.msra.mxu0 0.0
      %304 = vmatprep.subr.mxu0 0.0
      %305 = vmatpush1.msra.mxu0 0.0
      %306 = vmatprep.mubr.f32.mxu0 0.0
      %307 = vmatmul.mubr.f32.gmra.mrb[0].mxu0 %v240
      %v308 = vpop.f32.mrb[0].mxu0
      %v309 = vadd.f32 0.0, %v308
      %v310 = vpop.f32.mrb[0].mxu0
      %311 = vdwg.mxu0
      %v312 = vadd.f32 %v238, %v309
      %v313 = vstv %s68
      %v314 = vmul.f32 %v313, %v312
      %v315 = vadd.f32 %v69, %v314
      %v316 = vmul.f32 %v315, %v315
      %v317 = vadd.f32 %v316, 1.0
      %v318 = vrcp.pop %v317
      %v319 = vmul.f32 %v316, %v318
      %v320 = vmul.f32 %v315, -1.0
      %v322 = vsel %vm52, %v319, 0
      %324 = vmatprep.subr.mxu0 0.0
      %325 = vmatpush1.msra.mxu0 %v43
      %326 = vmatprep.subr.mxu0 0.0
      %327 = vmatpush1.msra.mxu0 %v44
      %328 = vmatprep.subr.mxu0 0.0
      %329 = vmatpush1.msra.mxu0 %v45
      %330 = vmatprep.subr.mxu0 0.0
      %331 = vmatpush1.msra.mxu0 %v46
      %332 = vmatprep.subr.mxu0 0.0
      %333 = vmatpush1.msra.mxu0 %v47
      %334 = vmatprep.subr.mxu0 0.0
      %335 = vmatpush1.msra.mxu0 %v48
      %336 = vmatprep.subr.mxu0 0.0
      %337 = vmatpush1.msra.mxu0 %v49
      %338 = vmatprep.subr.mxu0 0.0
      %339 = vmatpush1.msra.mxu0 %v50
      %340 = vmatprep.subr.mxu0 0.0
      %341 = vmatpush1.msra.mxu0 0.0
      %342 = vmatprep.subr.mxu0 0.0
      %343 = vmatpush1.msra.mxu0 0.0
      %344 = vmatprep.subr.mxu0 0.0
      %345 = vmatpush1.msra.mxu0 0.0
      %346 = vmatprep.subr.mxu0 0.0
      %347 = vmatpush1.msra.mxu0 0.0
      %348 = vmatprep.subr.mxu0 0.0
      %349 = vmatpush1.msra.mxu0 0.0
      %350 = vmatprep.subr.mxu0 0.0
      %351 = vmatpush1.msra.mxu0 0.0
      %352 = vmatprep.subr.mxu0 0.0
      %353 = vmatpush1.msra.mxu0 0.0
      %354 = vmatprep.subr.mxu0 0.0
      %355 = vmatpush1.msra.mxu0 0.0
      %356 = vmatprep.subr.mxu0 0.0
      %357 = vmatpush1.msra.mxu0 0.0
      %358 = vmatprep.subr.mxu0 0.0
      %359 = vmatpush1.msra.mxu0 0.0
      %360 = vmatprep.subr.mxu0 0.0
      %361 = vmatpush1.msra.mxu0 0.0
      %362 = vmatprep.subr.mxu0 0.0
      %363 = vmatpush1.msra.mxu0 0.0
      %364 = vmatprep.subr.mxu0 0.0
      %365 = vmatpush1.msra.mxu0 0.0
      %366 = vmatprep.subr.mxu0 0.0
      %367 = vmatpush1.msra.mxu0 0.0
      %368 = vmatprep.subr.mxu0 0.0
      %369 = vmatpush1.msra.mxu0 0.0
      %370 = vmatprep.subr.mxu0 0.0
      %371 = vmatpush1.msra.mxu0 0.0
      %372 = vmatprep.subr.mxu0 0.0
      %373 = vmatpush1.msra.mxu0 0.0
      %374 = vmatprep.subr.mxu0 0.0
      %375 = vmatpush1.msra.mxu0 0.0
      %376 = vmatprep.subr.mxu0 0.0
      %377 = vmatpush1.msra.mxu0 0.0
      %378 = vmatprep.subr.mxu0 0.0
      %379 = vmatpush1.msra.mxu0 0.0
      %380 = vmatprep.subr.mxu0 0.0
      %381 = vmatpush1.msra.mxu0 0.0
      %382 = vmatprep.subr.mxu0 0.0
      %383 = vmatpush1.msra.mxu0 0.0
      %384 = vmatprep.subr.mxu0 0.0
      %385 = vmatpush1.msra.mxu0 0.0
      %386 = vmatprep.subr.mxu0 0.0
      %387 = vmatpush1.msra.mxu0 0.0
      %388 = vmatprep.mubr.f32.mxu0 0.0
      %389 = vmatmul.mubr.f32.gmra.mrb[0].mxu0 %v322
      %v390 = vpop.f32.mrb[0].mxu0
      %v391 = vadd.f32 0.0, %v390
      %v392 = vpop.f32.mrb[0].mxu0
      %393 = vdwg.mxu0
      %v394 = vadd.f32 %v320, %v391
      %v395 = vrcp.pop 6.0
      %s396 = vtos %v395
      %s397 = smul.f32 %s68, %s396
      %v398 = vmul.f32 %v231, 2.0
      %v399 = vadd.f32 %v148, %v398
      %v400 = vmul.f32 %v312, 2.0
      %v401 = vadd.f32 %v399, %v400
      %v402 = vadd.f32 %v401, %v394
      %v403 = vstv %s397
      %v404 = vmul.f32 %v403, %v402
      %v405 = vadd.f32 %v69, %v404
      %v406 = vmul.f32 %v405, %v405
      %v407 = vadd.f32 %v406, 1.0
      %v408 = vrcp.pop %v407
      %v409 = vmul.f32 %v406, %v408
      %v410 = vmul.f32 %v405, -1.0
      %v412 = vsel %vm52, %v409, 0
      %414 = vmatprep.subr.mxu0 0.0
      %415 = vmatpush1.msra.mxu0 %v43
      %416 = vmatprep.subr.mxu0 0.0
      %417 = vmatpush1.msra.mxu0 %v44
      %418 = vmatprep.subr.mxu0 0.0
      %419 = vmatpush1.msra.mxu0 %v45
      %420 = vmatprep.subr.mxu0 0.0
      %421 = vmatpush1.msra.mxu0 %v46
      %422 = vmatprep.subr.mxu0 0.0
      %423 = vmatpush1.msra.mxu0 %v47
      %424 = vmatprep.subr.mxu0 0.0
      %425 = vmatpush1.msra.mxu0 %v48
      %426 = vmatprep.subr.mxu0 0.0
      %427 = vmatpush1.msra.mxu0 %v49
      %428 = vmatprep.subr.mxu0 0.0
      %429 = vmatpush1.msra.mxu0 %v50
      %430 = vmatprep.subr.mxu0 0.0
      %431 = vmatpush1.msra.mxu0 0.0
      %432 = vmatprep.subr.mxu0 0.0
      %433 = vmatpush1.msra.mxu0 0.0
      %434 = vmatprep.subr.mxu0 0.0
      %435 = vmatpush1.msra.mxu0 0.0
      %436 = vmatprep.subr.mxu0 0.0
      %437 = vmatpush1.msra.mxu0 0.0
      %438 = vmatprep.subr.mxu0 0.0
      %439 = vmatpush1.msra.mxu0 0.0
      %440 = vmatprep.subr.mxu0 0.0
      %441 = vmatpush1.msra.mxu0 0.0
      %442 = vmatprep.subr.mxu0 0.0
      %443 = vmatpush1.msra.mxu0 0.0
      %444 = vmatprep.subr.mxu0 0.0
      %445 = vmatpush1.msra.mxu0 0.0
      %446 = vmatprep.subr.mxu0 0.0
      %447 = vmatpush1.msra.mxu0 0.0
      %448 = vmatprep.subr.mxu0 0.0
      %449 = vmatpush1.msra.mxu0 0.0
      %450 = vmatprep.subr.mxu0 0.0
      %451 = vmatpush1.msra.mxu0 0.0
      %452 = vmatprep.subr.mxu0 0.0
      %453 = vmatpush1.msra.mxu0 0.0
      %454 = vmatprep.subr.mxu0 0.0
      %455 = vmatpush1.msra.mxu0 0.0
      %456 = vmatprep.subr.mxu0 0.0
      %457 = vmatpush1.msra.mxu0 0.0
      %458 = vmatprep.subr.mxu0 0.0
      %459 = vmatpush1.msra.mxu0 0.0
      %460 = vmatprep.subr.mxu0 0.0
      %461 = vmatpush1.msra.mxu0 0.0
      %462 = vmatprep.subr.mxu0 0.0
      %463 = vmatpush1.msra.mxu0 0.0
      %464 = vmatprep.subr.mxu0 0.0
      %465 = vmatpush1.msra.mxu0 0.0
      %466 = vmatprep.subr.mxu0 0.0
      %467 = vmatpush1.msra.mxu0 0.0
      %468 = vmatprep.subr.mxu0 0.0
      %469 = vmatpush1.msra.mxu0 0.0
      %470 = vmatprep.subr.mxu0 0.0
      %471 = vmatpush1.msra.mxu0 0.0
      %472 = vmatprep.subr.mxu0 0.0
      %473 = vmatpush1.msra.mxu0 0.0
      %474 = vmatprep.subr.mxu0 0.0
      %475 = vmatpush1.msra.mxu0 0.0
      %476 = vmatprep.subr.mxu0 0.0
      %477 = vmatpush1.msra.mxu0 0.0
      %478 = vmatprep.mubr.f32.mxu0 0.0
      %479 = vmatmul.mubr.f32.gmra.mrb[0].mxu0 %v412
      %v480 = vpop.f32.mrb[0].mxu0
      %v481 = vadd.f32 0.0, %v480
      %v482 = vpop.f32.mrb[0].mxu0
      %483 = vdwg.mxu0
      %v484 = vadd.f32 %v410, %v481
      %v485 = vmul.f32 %v150, %v484
      %v486 = vadd.f32 %v405, %v485
      %v487 = vmul.f32 %v486, %v486
      %v488 = vadd.f32 %v487, 1.0
      %v489 = vrcp.pop %v488
      %v490 = vmul.f32 %v487, %v489
      %v491 = vmul.f32 %v486, -1.0
      %v493 = vsel %vm52, %v490, 0
      %495 = vmatprep.subr.mxu0 0.0
      %496 = vmatpush1.msra.mxu0 %v43
      %497 = vmatprep.subr.mxu0 0.0
      %498 = vmatpush1.msra.mxu0 %v44
      %499 = vmatprep.subr.mxu0 0.0
      %500 = vmatpush1.msra.mxu0 %v45
      %501 = vmatprep.subr.mxu0 0.0
      %502 = vmatpush1.msra.mxu0 %v46
      %503 = vmatprep.subr.mxu0 0.0
      %504 = vmatpush1.msra.mxu0 %v47
      %505 = vmatprep.subr.mxu0 0.0
      %506 = vmatpush1.msra.mxu0 %v48
      %507 = vmatprep.subr.mxu0 0.0
      %508 = vmatpush1.msra.mxu0 %v49
      %509 = vmatprep.subr.mxu0 0.0
      %510 = vmatpush1.msra.mxu0 %v50
      %511 = vmatprep.subr.mxu0 0.0
      %512 = vmatpush1.msra.mxu0 0.0
      %513 = vmatprep.subr.mxu0 0.0
      %514 = vmatpush1.msra.mxu0 0.0
      %515 = vmatprep.subr.mxu0 0.0
      %516 = vmatpush1.msra.mxu0 0.0
      %517 = vmatprep.subr.mxu0 0.0
      %518 = vmatpush1.msra.mxu0 0.0
      %519 = vmatprep.subr.mxu0 0.0
      %520 = vmatpush1.msra.mxu0 0.0
      %521 = vmatprep.subr.mxu0 0.0
      %522 = vmatpush1.msra.mxu0 0.0
      %523 = vmatprep.subr.mxu0 0.0
      %524 = vmatpush1.msra.mxu0 0.0
      %525 = vmatprep.subr.mxu0 0.0
      %526 = vmatpush1.msra.mxu0 0.0
      %527 = vmatprep.subr.mxu0 0.0
      %528 = vmatpush1.msra.mxu0 0.0
      %529 = vmatprep.subr.mxu0 0.0
      %530 = vmatpush1.msra.mxu0 0.0
      %531 = vmatprep.subr.mxu0 0.0
      %532 = vmatpush1.msra.mxu0 0.0
      %533 = vmatprep.subr.mxu0 0.0
      %534 = vmatpush1.msra.mxu0 0.0
      %535 = vmatprep.subr.mxu0 0.0
      %536 = vmatpush1.msra.mxu0 0.0
      %537 = vmatprep.subr.mxu0 0.0
      %538 = vmatpush1.msra.mxu0 0.0
      %539 = vmatprep.subr.mxu0 0.0
      %540 = vmatpush1.msra.mxu0 0.0
      %541 = vmatprep.subr.mxu0 0.0
      %542 = vmatpush1.msra.mxu0 0.0
      %543 = vmatprep.subr.mxu0 0.0
      %544 = vmatpush1.msra.mxu0 0.0
      %545 = vmatprep.subr.mxu0 0.0
      %546 = vmatpush1.msra.mxu0 0.0
      %547 = vmatprep.subr.mxu0 0.0
      %548 = vmatpush1.msra.mxu0 0.0
      %549 = vmatprep.subr.mxu0 0.0
      %550 = vmatpush1.msra.mxu0 0.0
      %551 = vmatprep.subr.mxu0 0.0
      %552 = vmatpush1.msra.mxu0 0.0
      %553 = vmatprep.subr.mxu0 0.0
      %554 = vmatpush1.msra.mxu0 0.0
      %555 = vmatprep.subr.mxu0 0.0
      %556 = vmatpush1.msra.mxu0 0.0
      %557 = vmatprep.subr.mxu0 0.0
      %558 = vmatpush1.msra.mxu0 0.0
      %559 = vmatprep.mubr.f32.mxu0 0.0
      %560 = vmatmul.mubr.f32.gmra.mrb[0].mxu0 %v493
      %v561 = vpop.f32.mrb[0].mxu0
      %v562 = vadd.f32 0.0, %v561
      %v563 = vpop.f32.mrb[0].mxu0
      %564 = vdwg.mxu0
      %v565 = vadd.f32 %v491, %v562
      %v566 = vmul.f32 %v150, %v565
      %v567 = vadd.f32 %v405, %v566
      %v568 = vmul.f32 %v567, %v567
      %v569 = vadd.f32 %v568, 1.0
      %v570 = vrcp.pop %v569
      %v571 = vmul.f32 %v568, %v570
      %v572 = vmul.f32 %v567, -1.0
      %v574 = vsel %vm52, %v571, 0
      %576 = vmatprep.subr.mxu0 0.0
      %577 = vmatpush1.msra.mxu0 %v43
      %578 = vmatprep.subr.mxu0 0.0
      %579 = vmatpush1.msra.mxu0 %v44
      %580 = vmatprep.subr.mxu0 0.0
      %581 = vmatpush1.msra.mxu0 %v45
      %582 = vmatprep.subr.mxu0 0.0
      %583 = vmatpush1.msra.mxu0 %v46
      %584 = vmatprep.subr.mxu0 0.0
      %585 = vmatpush1.msra.mxu0 %v47
      %586 = vmatprep.subr.mxu0 0.0
      %587 = vmatpush1.msra.mxu0 %v48
      %588 = vmatprep.subr.mxu0 0.0
      %589 = vmatpush1.msra.mxu0 %v49
      %590 = vmatprep.subr.mxu0 0.0
      %591 = vmatpush1.msra.mxu0 %v50
      %592 = vmatprep.subr.mxu0 0.0
      %593 = vmatpush1.msra.mxu0 0.0
      %594 = vmatprep.subr.mxu0 0.0
      %595 = vmatpush1.msra.mxu0 0.0
      %596 = vmatprep.subr.mxu0 0.0
      %597 = vmatpush1.msra.mxu0 0.0
      %598 = vmatprep.subr.mxu0 0.0
      %599 = vmatpush1.msra.mxu0 0.0
      %600 = vmatprep.subr.mxu0 0.0
      %601 = vmatpush1.msra.mxu0 0.0
      %602 = vmatprep.subr.mxu0 0.0
      %603 = vmatpush1.msra.mxu0 0.0
      %604 = vmatprep.subr.mxu0 0.0
      %605 = vmatpush1.msra.mxu0 0.0
      %606 = vmatprep.subr.mxu0 0.0
      %607 = vmatpush1.msra.mxu0 0.0
      %608 = vmatprep.subr.mxu0 0.0
      %609 = vmatpush1.msra.mxu0 0.0
      %610 = vmatprep.subr.mxu0 0.0
      %611 = vmatpush1.msra.mxu0 0.0
      %612 = vmatprep.subr.mxu0 0.0
      %613 = vmatpush1.msra.mxu0 0.0
      %614 = vmatprep.subr.mxu0 0.0
      %615 = vmatpush1.msra.mxu0 0.0
      %616 = vmatprep.subr.mxu0 0.0
      %617 = vmatpush1.msra.mxu0 0.0
      %618 = vmatprep.subr.mxu0 0.0
      %619 = vmatpush1.msra.mxu0 0.0
      %620 = vmatprep.subr.mxu0 0.0
      %621 = vmatpush1.msra.mxu0 0.0
      %622 = vmatprep.subr.mxu0 0.0
      %623 = vmatpush1.msra.mxu0 0.0
      %624 = vmatprep.subr.mxu0 0.0
      %625 = vmatpush1.msra.mxu0 0.0
      %626 = vmatprep.subr.mxu0 0.0
      %627 = vmatpush1.msra.mxu0 0.0
      %628 = vmatprep.subr.mxu0 0.0
      %629 = vmatpush1.msra.mxu0 0.0
      %630 = vmatprep.subr.mxu0 0.0
      %631 = vmatpush1.msra.mxu0 0.0
      %632 = vmatprep.subr.mxu0 0.0
      %633 = vmatpush1.msra.mxu0 0.0
      %634 = vmatprep.subr.mxu0 0.0
      %635 = vmatpush1.msra.mxu0 0.0
      %636 = vmatprep.subr.mxu0 0.0
      %637 = vmatpush1.msra.mxu0 0.0
      %638 = vmatprep.subr.mxu0 0.0
      %639 = vmatpush1.msra.mxu0 0.0
      %640 = vmatprep.mubr.f32.mxu0 0.0
      %641 = vmatmul.mubr.f32.gmra.mrb[0].mxu0 %v574
      %v642 = vpop.f32.mrb[0].mxu0
      %v643 = vadd.f32 0.0, %v642
      %v644 = vpop.f32.mrb[0].mxu0
      %645 = vdwg.mxu0
      %v646 = vadd.f32 %v572, %v643
      %v647 = vmul.f32 %v313, %v646
      %v648 = vadd.f32 %v405, %v647
      %v649 = vmul.f32 %v648, %v648
      %v650 = vadd.f32 %v649, 1.0
      %v651 = vrcp.pop %v650
      %v652 = vmul.f32 %v649, %v651
      %v653 = vmul.f32 %v648, -1.0
      %v655 = vsel %vm52, %v652, 0
      %657 = vmatprep.subr.mxu0 0.0
      %658 = vmatpush1.msra.mxu0 %v43
      %659 = vmatprep.subr.mxu0 0.0
      %660 = vmatpush1.msra.mxu0 %v44
      %661 = vmatprep.subr.mxu0 0.0
      %662 = vmatpush1.msra.mxu0 %v45
      %663 = vmatprep.subr.mxu0 0.0
      %664 = vmatpush1.msra.mxu0 %v46
      %665 = vmatprep.subr.mxu0 0.0
      %666 = vmatpush1.msra.mxu0 %v47
      %667 = vmatprep.subr.mxu0 0.0
      %668 = vmatpush1.msra.mxu0 %v48
      %669 = vmatprep.subr.mxu0 0.0
      %670 = vmatpush1.msra.mxu0 %v49
      %671 = vmatprep.subr.mxu0 0.0
      %672 = vmatpush1.msra.mxu0 %v50
      %673 = vmatprep.subr.mxu0 0.0
      %674 = vmatpush1.msra.mxu0 0.0
      %675 = vmatprep.subr.mxu0 0.0
      %676 = vmatpush1.msra.mxu0 0.0
      %677 = vmatprep.subr.mxu0 0.0
      %678 = vmatpush1.msra.mxu0 0.0
      %679 = vmatprep.subr.mxu0 0.0
      %680 = vmatpush1.msra.mxu0 0.0
      %681 = vmatprep.subr.mxu0 0.0
      %682 = vmatpush1.msra.mxu0 0.0
      %683 = vmatprep.subr.mxu0 0.0
      %684 = vmatpush1.msra.mxu0 0.0
      %685 = vmatprep.subr.mxu0 0.0
      %686 = vmatpush1.msra.mxu0 0.0
      %687 = vmatprep.subr.mxu0 0.0
      %688 = vmatpush1.msra.mxu0 0.0
      %689 = vmatprep.subr.mxu0 0.0
      %690 = vmatpush1.msra.mxu0 0.0
      %691 = vmatprep.subr.mxu0 0.0
      %692 = vmatpush1.msra.mxu0 0.0
      %693 = vmatprep.subr.mxu0 0.0
      %694 = vmatpush1.msra.mxu0 0.0
      %695 = vmatprep.subr.mxu0 0.0
      %696 = vmatpush1.msra.mxu0 0.0
      %697 = vmatprep.subr.mxu0 0.0
      %698 = vmatpush1.msra.mxu0 0.0
      %699 = vmatprep.subr.mxu0 0.0
      %700 = vmatpush1.msra.mxu0 0.0
      %701 = vmatprep.subr.mxu0 0.0
      %702 = vmatpush1.msra.mxu0 0.0
      %703 = vmatprep.subr.mxu0 0.0
      %704 = vmatpush1.msra.mxu0 0.0
      %705 = vmatprep.subr.mxu0 0.0
      %706 = vmatpush1.msra.mxu0 0.0
      %707 = vmatprep.subr.mxu0 0.0
      %708 = vmatpush1.msra.mxu0 0.0
      %709 = vmatprep.subr.mxu0 0.0
      %710 = vmatpush1.msra.mxu0 0.0
      %711 = vmatprep.subr.mxu0 0.0
      %712 = vmatpush1.msra.mxu0 0.0
      %713 = vmatprep.subr.mxu0 0.0
      %714 = vmatpush1.msra.mxu0 0.0
      %715 = vmatprep.subr.mxu0 0.0
      %716 = vmatpush1.msra.mxu0 0.0
      %717 = vmatprep.subr.mxu0 0.0
      %718 = vmatpush1.msra.mxu0 0.0
      %719 = vmatprep.subr.mxu0 0.0
      %720 = vmatpush1.msra.mxu0 0.0
      %721 = vmatprep.mubr.f32.mxu0 0.0
      %722 = vmatmul.mubr.f32.gmra.mrb[0].mxu0 %v655
      %v723 = vpop.f32.mrb[0].mxu0
      %v724 = vadd.f32 0.0, %v723
      %v725 = vpop.f32.mrb[0].mxu0
      %726 = vdwg.mxu0
      %v727 = vadd.f32 %v653, %v724
      %v728 = vmul.f32 %v565, 2.0
      %v729 = vadd.f32 %v484, %v728
      %v730 = vmul.f32 %v646, 2.0
      %v731 = vadd.f32 %v729, %v730
      %v732 = vadd.f32 %v731, %v727
      %v733 = vmul.f32 %v403, %v732
      %v734 = vadd.f32 %v405, %v733
      %v735 = vmul.f32 %v734, %v734
      %v736 = vadd.f32 %v735, 1.0
      %v737 = vrcp.pop %v736
      %v738 = vmul.f32 %v735, %v737
      %v739 = vmul.f32 %v734, -1.0
      %v741 = vsel %vm52, %v738, 0
      %743 = vmatprep.subr.mxu0 0.0
      %744 = vmatpush1.msra.mxu0 %v43
      %745 = vmatprep.subr.mxu0 0.0
      %746 = vmatpush1.msra.mxu0 %v44
      %747 = vmatprep.subr.mxu0 0.0
      %748 = vmatpush1.msra.mxu0 %v45
      %749 = vmatprep.subr.mxu0 0.0
      %750 = vmatpush1.msra.mxu0 %v46
      %751 = vmatprep.subr.mxu0 0.0
      %752 = vmatpush1.msra.mxu0 %v47
      %753 = vmatprep.subr.mxu0 0.0
      %754 = vmatpush1.msra.mxu0 %v48
      %755 = vmatprep.subr.mxu0 0.0
      %756 = vmatpush1.msra.mxu0 %v49
      %757 = vmatprep.subr.mxu0 0.0
      %758 = vmatpush1.msra.mxu0 %v50
      %759 = vmatprep.subr.mxu0 0.0
      %760 = vmatpush1.msra.mxu0 0.0
      %761 = vmatprep.subr.mxu0 0.0
      %762 = vmatpush1.msra.mxu0 0.0
      %763 = vmatprep.subr.mxu0 0.0
      %764 = vmatpush1.msra.mxu0 0.0
      %765 = vmatprep.subr.mxu0 0.0
      %766 = vmatpush1.msra.mxu0 0.0
      %767 = vmatprep.subr.mxu0 0.0
      %768 = vmatpush1.msra.mxu0 0.0
      %769 = vmatprep.subr.mxu0 0.0
      %770 = vmatpush1.msra.mxu0 0.0
      %771 = vmatprep.subr.mxu0 0.0
      %772 = vmatpush1.msra.mxu0 0.0
      %773 = vmatprep.subr.mxu0 0.0
      %774 = vmatpush1.msra.mxu0 0.0
      %775 = vmatprep.subr.mxu0 0.0
      %776 = vmatpush1.msra.mxu0 0.0
      %777 = vmatprep.subr.mxu0 0.0
      %778 = vmatpush1.msra.mxu0 0.0
      %779 = vmatprep.subr.mxu0 0.0
      %780 = vmatpush1.msra.mxu0 0.0
      %781 = vmatprep.subr.mxu0 0.0
      %782 = vmatpush1.msra.mxu0 0.0
      %783 = vmatprep.subr.mxu0 0.0
      %784 = vmatpush1.msra.mxu0 0.0
      %785 = vmatprep.subr.mxu0 0.0
      %786 = vmatpush1.msra.mxu0 0.0
      %787 = vmatprep.subr.mxu0 0.0
      %788 = vmatpush1.msra.mxu0 0.0
      %789 = vmatprep.subr.mxu0 0.0
      %790 = vmatpush1.msra.mxu0 0.0
      %791 = vmatprep.subr.mxu0 0.0
      %792 = vmatpush1.msra.mxu0 0.0
      %793 = vmatprep.subr.mxu0 0.0
      %794 = vmatpush1.msra.mxu0 0.0
      %795 = vmatprep.subr.mxu0 0.0
      %796 = vmatpush1.msra.mxu0 0.0
      %797 = vmatprep.subr.mxu0 0.0
      %798 = vmatpush1.msra.mxu0 0.0
      %799 = vmatprep.subr.mxu0 0.0
      %800 = vmatpush1.msra.mxu0 0.0
      %801 = vmatprep.subr.mxu0 0.0
      %802 = vmatpush1.msra.mxu0 0.0
      %803 = vmatprep.subr.mxu0 0.0
      %804 = vmatpush1.msra.mxu0 0.0
      %805 = vmatprep.subr.mxu0 0.0
      %806 = vmatpush1.msra.mxu0 0.0
      %807 = vmatprep.mubr.f32.mxu0 0.0
      %808 = vmatmul.mubr.f32.gmra.mrb[0].mxu0 %v741
      %v809 = vpop.f32.mrb[0].mxu0
      %v810 = vadd.f32 0.0, %v809
      %v811 = vpop.f32.mrb[0].mxu0
      %812 = vdwg.mxu0
      %v813 = vadd.f32 %v739, %v810
      %v814 = vmul.f32 %v150, %v813
      %v815 = vadd.f32 %v734, %v814
      %v816 = vmul.f32 %v815, %v815
      %v817 = vadd.f32 %v816, 1.0
      %v818 = vrcp.pop %v817
      %v819 = vmul.f32 %v816, %v818
      %v820 = vmul.f32 %v815, -1.0
      %v822 = vsel %vm52, %v819, 0
      %824 = vmatprep.subr.mxu0 0.0
      %825 = vmatpush1.msra.mxu0 %v43
      %826 = vmatprep.subr.mxu0 0.0
      %827 = vmatpush1.msra.mxu0 %v44
      %828 = vmatprep.subr.mxu0 0.0
      %829 = vmatpush1.msra.mxu0 %v45
      %830 = vmatprep.subr.mxu0 0.0
      %831 = vmatpush1.msra.mxu0 %v46
      %832 = vmatprep.subr.mxu0 0.0
      %833 = vmatpush1.msra.mxu0 %v47
      %834 = vmatprep.subr.mxu0 0.0
      %835 = vmatpush1.msra.mxu0 %v48
      %836 = vmatprep.subr.mxu0 0.0
      %837 = vmatpush1.msra.mxu0 %v49
      %838 = vmatprep.subr.mxu0 0.0
      %839 = vmatpush1.msra.mxu0 %v50
      %840 = vmatprep.subr.mxu0 0.0
      %841 = vmatpush1.msra.mxu0 0.0
      %842 = vmatprep.subr.mxu0 0.0
      %843 = vmatpush1.msra.mxu0 0.0
      %844 = vmatprep.subr.mxu0 0.0
      %845 = vmatpush1.msra.mxu0 0.0
      %846 = vmatprep.subr.mxu0 0.0
      %847 = vmatpush1.msra.mxu0 0.0
      %848 = vmatprep.subr.mxu0 0.0
      %849 = vmatpush1.msra.mxu0 0.0
      %850 = vmatprep.subr.mxu0 0.0
      %851 = vmatpush1.msra.mxu0 0.0
      %852 = vmatprep.subr.mxu0 0.0
      %853 = vmatpush1.msra.mxu0 0.0
      %854 = vmatprep.subr.mxu0 0.0
      %855 = vmatpush1.msra.mxu0 0.0
      %856 = vmatprep.subr.mxu0 0.0
      %857 = vmatpush1.msra.mxu0 0.0
      %858 = vmatprep.subr.mxu0 0.0
      %859 = vmatpush1.msra.mxu0 0.0
      %860 = vmatprep.subr.mxu0 0.0
      %861 = vmatpush1.msra.mxu0 0.0
      %862 = vmatprep.subr.mxu0 0.0
      %863 = vmatpush1.msra.mxu0 0.0
      %864 = vmatprep.subr.mxu0 0.0
      %865 = vmatpush1.msra.mxu0 0.0
      %866 = vmatprep.subr.mxu0 0.0
      %867 = vmatpush1.msra.mxu0 0.0
      %868 = vmatprep.subr.mxu0 0.0
      %869 = vmatpush1.msra.mxu0 0.0
      %870 = vmatprep.subr.mxu0 0.0
      %871 = vmatpush1.msra.mxu0 0.0
      %872 = vmatprep.subr.mxu0 0.0
      %873 = vmatpush1.msra.mxu0 0.0
      %874 = vmatprep.subr.mxu0 0.0
      %875 = vmatpush1.msra.mxu0 0.0
      %876 = vmatprep.subr.mxu0 0.0
      %877 = vmatpush1.msra.mxu0 0.0
      %878 = vmatprep.subr.mxu0 0.0
      %879 = vmatpush1.msra.mxu0 0.0
      %880 = vmatprep.subr.mxu0 0.0
      %881 = vmatpush1.msra.mxu0 0.0
      %882 = vmatprep.subr.mxu0 0.0
      %883 = vmatpush1.msra.mxu0 0.0
      %884 = vmatprep.subr.mxu0 0.0
      %885 = vmatpush1.msra.mxu0 0.0
      %886 = vmatprep.subr.mxu0 0.0
      %887 = vmatpush1.msra.mxu0 0.0
      %888 = vmatprep.mubr.f32.mxu0 0.0
      %889 = vmatmul.mubr.f32.gmra.mrb[0].mxu0 %v822
      %v890 = vpop.f32.mrb[0].mxu0
      %v891 = vadd.f32 0.0, %v890
      %v892 = vpop.f32.mrb[0].mxu0
      %893 = vdwg.mxu0
      %v894 = vadd.f32 %v820, %v891
      %v895 = vmul.f32 %v150, %v894
      %v896 = vadd.f32 %v734, %v895
      %v897 = vmul.f32 %v896, %v896
      %v898 = vadd.f32 %v897, 1.0
      %v899 = vrcp.pop %v898
      %v900 = vmul.f32 %v897, %v899
      %v901 = vmul.f32 %v896, -1.0
      %v903 = vsel %vm52, %v900, 0
      %905 = vmatprep.subr.mxu0 0.0
      %906 = vmatpush1.msra.mxu0 %v43
      %907 = vmatprep.subr.mxu0 0.0
      %908 = vmatpush1.msra.mxu0 %v44
      %909 = vmatprep.subr.mxu0 0.0
      %910 = vmatpush1.msra.mxu0 %v45
      %911 = vmatprep.subr.mxu0 0.0
      %912 = vmatpush1.msra.mxu0 %v46
      %913 = vmatprep.subr.mxu0 0.0
      %914 = vmatpush1.msra.mxu0 %v47
      %915 = vmatprep.subr.mxu0 0.0
      %916 = vmatpush1.msra.mxu0 %v48
      %917 = vmatprep.subr.mxu0 0.0
      %918 = vmatpush1.msra.mxu0 %v49
      %919 = vmatprep.subr.mxu0 0.0
      %920 = vmatpush1.msra.mxu0 %v50
      %921 = vmatprep.subr.mxu0 0.0
      %922 = vmatpush1.msra.mxu0 0.0
      %923 = vmatprep.subr.mxu0 0.0
      %924 = vmatpush1.msra.mxu0 0.0
      %925 = vmatprep.subr.mxu0 0.0
      %926 = vmatpush1.msra.mxu0 0.0
      %927 = vmatprep.subr.mxu0 0.0
      %928 = vmatpush1.msra.mxu0 0.0
      %929 = vmatprep.subr.mxu0 0.0
      %930 = vmatpush1.msra.mxu0 0.0
      %931 = vmatprep.subr.mxu0 0.0
      %932 = vmatpush1.msra.mxu0 0.0
      %933 = vmatprep.subr.mxu0 0.0
      %934 = vmatpush1.msra.mxu0 0.0
      %935 = vmatprep.subr.mxu0 0.0
      %936 = vmatpush1.msra.mxu0 0.0
      %937 = vmatprep.subr.mxu0 0.0
      %938 = vmatpush1.msra.mxu0 0.0
      %939 = vmatprep.subr.mxu0 0.0
      %940 = vmatpush1.msra.mxu0 0.0
      %941 = vmatprep.subr.mxu0 0.0
      %942 = vmatpush1.msra.mxu0 0.0
      %943 = vmatprep.subr.mxu0 0.0
      %944 = vmatpush1.msra.mxu0 0.0
      %945 = vmatprep.subr.mxu0 0.0
      %946 = vmatpush1.msra.mxu0 0.0
      %947 = vmatprep.subr.mxu0 0.0
      %948 = vmatpush1.msra.mxu0 0.0
      %949 = vmatprep.subr.mxu0 0.0
      %950 = vmatpush1.msra.mxu0 0.0
      %951 = vmatprep.subr.mxu0 0.0
      %952 = vmatpush1.msra.mxu0 0.0
      %953 = vmatprep.subr.mxu0 0.0
      %954 = vmatpush1.msra.mxu0 0.0
      %955 = vmatprep.subr.mxu0 0.0
      %956 = vmatpush1.msra.mxu0 0.0
      %957 = vmatprep.subr.mxu0 0.0
      %958 = vmatpush1.msra.mxu0 0.0
      %959 = vmatprep.subr.mxu0 0.0
      %960 = vmatpush1.msra.mxu0 0.0
      %961 = vmatprep.subr.mxu0 0.0
      %962 = vmatpush1.msra.mxu0 0.0
      %963 = vmatprep.subr.mxu0 0.0
      %964 = vmatpush1.msra.mxu0 0.0
      %965 = vmatprep.subr.mxu0 0.0
      %966 = vmatpush1.msra.mxu0 0.0
      %967 = vmatprep.subr.mxu0 0.0
      %968 = vmatpush1.msra.mxu0 0.0
      %969 = vmatprep.mubr.f32.mxu0 0.0
      %970 = vmatmul.mubr.f32.gmra.mrb[0].mxu0 %v903
      %v971 = vpop.f32.mrb[0].mxu0
      %v972 = vadd.f32 0.0, %v971
      %v973 = vpop.f32.mrb[0].mxu0
      %974 = vdwg.mxu0
      %v975 = vadd.f32 %v901, %v972
      %v976 = vmul.f32 %v313, %v975
      %v977 = vadd.f32 %v734, %v976
      %v978 = vmul.f32 %v977, %v977
      %v979 = vadd.f32 %v978, 1.0
      %v980 = vrcp.pop %v979
      %v981 = vmul.f32 %v978, %v980
      %v982 = vmul.f32 %v977, -1.0
      %v984 = vsel %vm52, %v981, 0
      %986 = vmatprep.subr.mxu0 0.0
      %987 = vmatpush1.msra.mxu0 %v43
      %988 = vmatprep.subr.mxu0 0.0
      %989 = vmatpush1.msra.mxu0 %v44
      %990 = vmatprep.subr.mxu0 0.0
      %991 = vmatpush1.msra.mxu0 %v45
      %992 = vmatprep.subr.mxu0 0.0
      %993 = vmatpush1.msra.mxu0 %v46
      %994 = vmatprep.subr.mxu0 0.0
      %995 = vmatpush1.msra.mxu0 %v47
      %996 = vmatprep.subr.mxu0 0.0
      %997 = vmatpush1.msra.mxu0 %v48
      %998 = vmatprep.subr.mxu0 0.0
      %999 = vmatpush1.msra.mxu0 %v49
      %1000 = vmatprep.subr.mxu0 0.0
      %1001 = vmatpush1.msra.mxu0 %v50
      %1002 = vmatprep.subr.mxu0 0.0
      %1003 = vmatpush1.msra.mxu0 0.0
      %1004 = vmatprep.subr.mxu0 0.0
      %1005 = vmatpush1.msra.mxu0 0.0
      %1006 = vmatprep.subr.mxu0 0.0
      %1007 = vmatpush1.msra.mxu0 0.0
      %1008 = vmatprep.subr.mxu0 0.0
      %1009 = vmatpush1.msra.mxu0 0.0
      %1010 = vmatprep.subr.mxu0 0.0
      %1011 = vmatpush1.msra.mxu0 0.0
      %1012 = vmatprep.subr.mxu0 0.0
      %1013 = vmatpush1.msra.mxu0 0.0
      %1014 = vmatprep.subr.mxu0 0.0
      %1015 = vmatpush1.msra.mxu0 0.0
      %1016 = vmatprep.subr.mxu0 0.0
      %1017 = vmatpush1.msra.mxu0 0.0
      %1018 = vmatprep.subr.mxu0 0.0
      %1019 = vmatpush1.msra.mxu0 0.0
      %1020 = vmatprep.subr.mxu0 0.0
      %1021 = vmatpush1.msra.mxu0 0.0
      %1022 = vmatprep.subr.mxu0 0.0
      %1023 = vmatpush1.msra.mxu0 0.0
      %1024 = vmatprep.subr.mxu0 0.0
      %1025 = vmatpush1.msra.mxu0 0.0
      %1026 = vmatprep.subr.mxu0 0.0
      %1027 = vmatpush1.msra.mxu0 0.0
      %1028 = vmatprep.subr.mxu0 0.0
      %1029 = vmatpush1.msra.mxu0 0.0
      %1030 = vmatprep.subr.mxu0 0.0
      %1031 = vmatpush1.msra.mxu0 0.0
      %1032 = vmatprep.subr.mxu0 0.0
      %1033 = vmatpush1.msra.mxu0 0.0
      %1034 = vmatprep.subr.mxu0 0.0
      %1035 = vmatpush1.msra.mxu0 0.0
      %1036 = vmatprep.subr.mxu0 0.0
      %1037 = vmatpush1.msra.mxu0 0.0
      %1038 = vmatprep.subr.mxu0 0.0
      %1039 = vmatpush1.msra.mxu0 0.0
      %1040 = vmatprep.subr.mxu0 0.0
      %1041 = vmatpush1.msra.mxu0 0.0
      %1042 = vmatprep.subr.mxu0 0.0
      %1043 = vmatpush1.msra.mxu0 0.0
      %1044 = vmatprep.subr.mxu0 0.0
      %1045 = vmatpush1.msra.mxu0 0.0
      %1046 = vmatprep.subr.mxu0 0.0
      %1047 = vmatpush1.msra.mxu0 0.0
      %1048 = vmatprep.subr.mxu0 0.0
      %1049 = vmatpush1.msra.mxu0 0.0
      %1050 = vmatprep.mubr.f32.mxu0 0.0
      %1051 = vmatmul.mubr.f32.gmra.mrb[0].mxu0 %v984
      %v1052 = vpop.f32.mrb[0].mxu0
      %v1053 = vadd.f32 0.0, %v1052
      %v1054 = vpop.f32.mrb[0].mxu0
      %1055 = vdwg.mxu0
      %v1056 = vadd.f32 %v982, %v1053
      %v1057 = vmul.f32 %v894, 2.0
      %v1058 = vadd.f32 %v813, %v1057
      %v1059 = vmul.f32 %v975, 2.0
      %v1060 = vadd.f32 %v1058, %v1059
      %v1061 = vadd.f32 %v1060, %v1056
      %v1062 = vmul.f32 %v403, %v1061
      %v1063 = vadd.f32 %v734, %v1062
      %v1064 = vmul.f32 %v1063, %v1063
      %v1065 = vadd.f32 %v1064, 1.0
      %v1066 = vrcp.pop %v1065
      %v1067 = vmul.f32 %v1064, %v1066
      %v1068 = vmul.f32 %v1063, -1.0
      %v1070 = vsel %vm52, %v1067, 0
      %1072 = vmatprep.subr.mxu0 0.0
      %1073 = vmatpush1.msra.mxu0 %v43
      %1074 = vmatprep.subr.mxu0 0.0
      %1075 = vmatpush1.msra.mxu0 %v44
      %1076 = vmatprep.subr.mxu0 0.0
      %1077 = vmatpush1.msra.mxu0 %v45
      %1078 = vmatprep.subr.mxu0 0.0
      %1079 = vmatpush1.msra.mxu0 %v46
      %1080 = vmatprep.subr.mxu0 0.0
      %1081 = vmatpush1.msra.mxu0 %v47
      %1082 = vmatprep.subr.mxu0 0.0
      %1083 = vmatpush1.msra.mxu0 %v48
      %1084 = vmatprep.subr.mxu0 0.0
      %1085 = vmatpush1.msra.mxu0 %v49
      %1086 = vmatprep.subr.mxu0 0.0
      %1087 = vmatpush1.msra.mxu0 %v50
      %1088 = vmatprep.subr.mxu0 0.0
      %1089 = vmatpush1.msra.mxu0 0.0
      %1090 = vmatprep.subr.mxu0 0.0
      %1091 = vmatpush1.msra.mxu0 0.0
      %1092 = vmatprep.subr.mxu0 0.0
      %1093 = vmatpush1.msra.mxu0 0.0
      %1094 = vmatprep.subr.mxu0 0.0
      %1095 = vmatpush1.msra.mxu0 0.0
      %1096 = vmatprep.subr.mxu0 0.0
      %1097 = vmatpush1.msra.mxu0 0.0
      %1098 = vmatprep.subr.mxu0 0.0
      %1099 = vmatpush1.msra.mxu0 0.0
      %1100 = vmatprep.subr.mxu0 0.0
      %1101 = vmatpush1.msra.mxu0 0.0
      %1102 = vmatprep.subr.mxu0 0.0
      %1103 = vmatpush1.msra.mxu0 0.0
      %1104 = vmatprep.subr.mxu0 0.0
      %1105 = vmatpush1.msra.mxu0 0.0
      %1106 = vmatprep.subr.mxu0 0.0
      %1107 = vmatpush1.msra.mxu0 0.0
      %1108 = vmatprep.subr.mxu0 0.0
      %1109 = vmatpush1.msra.mxu0 0.0
      %1110 = vmatprep.subr.mxu0 0.0
      %1111 = vmatpush1.msra.mxu0 0.0
      %1112 = vmatprep.subr.mxu0 0.0
      %1113 = vmatpush1.msra.mxu0 0.0
      %1114 = vmatprep.subr.mxu0 0.0
      %1115 = vmatpush1.msra.mxu0 0.0
      %1116 = vmatprep.subr.mxu0 0.0
      %1117 = vmatpush1.msra.mxu0 0.0
      %1118 = vmatprep.subr.mxu0 0.0
      %1119 = vmatpush1.msra.mxu0 0.0
      %1120 = vmatprep.subr.mxu0 0.0
      %1121 = vmatpush1.msra.mxu0 0.0
      %1122 = vmatprep.subr.mxu0 0.0
      %1123 = vmatpush1.msra.mxu0 0.0
      %1124 = vmatprep.subr.mxu0 0.0
      %1125 = vmatpush1.msra.mxu0 0.0
      %1126 = vmatprep.subr.mxu0 0.0
      %1127 = vmatpush1.msra.mxu0 0.0
      %1128 = vmatprep.subr.mxu0 0.0
      %1129 = vmatpush1.msra.mxu0 0.0
      %1130 = vmatprep.subr.mxu0 0.0
      %1131 = vmatpush1.msra.mxu0 0.0
      %1132 = vmatprep.subr.mxu0 0.0
      %1133 = vmatpush1.msra.mxu0 0.0
      %1134 = vmatprep.subr.mxu0 0.0
      %1135 = vmatpush1.msra.mxu0 0.0
      %1136 = vmatprep.mubr.f32.mxu0 0.0
      %1137 = vmatmul.mubr.f32.gmra.mrb[0].mxu0 %v1070
      %v1138 = vpop.f32.mrb[0].mxu0
      %v1139 = vadd.f32 0.0, %v1138
      %v1140 = vpop.f32.mrb[0].mxu0
      %1141 = vdwg.mxu0
      %v1142 = vadd.f32 %v1068, %v1139
      %v1143 = vmul.f32 %v150, %v1142
      %v1144 = vadd.f32 %v1063, %v1143
      %v1145 = vmul.f32 %v1144, %v1144
      %v1146 = vadd.f32 %v1145, 1.0
      %v1147 = vrcp.pop %v1146
      %v1148 = vmul.f32 %v1145, %v1147
      %v1149 = vmul.f32 %v1144, -1.0
      %v1151 = vsel %vm52, %v1148, 0
      %1153 = vmatprep.subr.mxu0 0.0
      %1154 = vmatpush1.msra.mxu0 %v43
      %1155 = vmatprep.subr.mxu0 0.0
      %1156 = vmatpush1.msra.mxu0 %v44
      %1157 = vmatprep.subr.mxu0 0.0
      %1158 = vmatpush1.msra.mxu0 %v45
      %1159 = vmatprep.subr.mxu0 0.0
      %1160 = vmatpush1.msra.mxu0 %v46
      %1161 = vmatprep.subr.mxu0 0.0
      %1162 = vmatpush1.msra.mxu0 %v47
      %1163 = vmatprep.subr.mxu0 0.0
      %1164 = vmatpush1.msra.mxu0 %v48
      %1165 = vmatprep.subr.mxu0 0.0
      %1166 = vmatpush1.msra.mxu0 %v49
      %1167 = vmatprep.subr.mxu0 0.0
      %1168 = vmatpush1.msra.mxu0 %v50
      %1169 = vmatprep.subr.mxu0 0.0
      %1170 = vmatpush1.msra.mxu0 0.0
      %1171 = vmatprep.subr.mxu0 0.0
      %1172 = vmatpush1.msra.mxu0 0.0
      %1173 = vmatprep.subr.mxu0 0.0
      %1174 = vmatpush1.msra.mxu0 0.0
      %1175 = vmatprep.subr.mxu0 0.0
      %1176 = vmatpush1.msra.mxu0 0.0
      %1177 = vmatprep.subr.mxu0 0.0
      %1178 = vmatpush1.msra.mxu0 0.0
      %1179 = vmatprep.subr.mxu0 0.0
      %1180 = vmatpush1.msra.mxu0 0.0
      %1181 = vmatprep.subr.mxu0 0.0
      %1182 = vmatpush1.msra.mxu0 0.0
      %1183 = vmatprep.subr.mxu0 0.0
      %1184 = vmatpush1.msra.mxu0 0.0
      %1185 = vmatprep.subr.mxu0 0.0
      %1186 = vmatpush1.msra.mxu0 0.0
      %1187 = vmatprep.subr.mxu0 0.0
      %1188 = vmatpush1.msra.mxu0 0.0
      %1189 = vmatprep.subr.mxu0 0.0
      %1190 = vmatpush1.msra.mxu0 0.0
      %1191 = vmatprep.subr.mxu0 0.0
      %1192 = vmatpush1.msra.mxu0 0.0
      %1193 = vmatprep.subr.mxu0 0.0
      %1194 = vmatpush1.msra.mxu0 0.0
      %1195 = vmatprep.subr.mxu0 0.0
      %1196 = vmatpush1.msra.mxu0 0.0
      %1197 = vmatprep.subr.mxu0 0.0
      %1198 = vmatpush1.msra.mxu0 0.0
      %1199 = vmatprep.subr.mxu0 0.0
      %1200 = vmatpush1.msra.mxu0 0.0
      %1201 = vmatprep.subr.mxu0 0.0
      %1202 = vmatpush1.msra.mxu0 0.0
      %1203 = vmatprep.subr.mxu0 0.0
      %1204 = vmatpush1.msra.mxu0 0.0
      %1205 = vmatprep.subr.mxu0 0.0
      %1206 = vmatpush1.msra.mxu0 0.0
      %1207 = vmatprep.subr.mxu0 0.0
      %1208 = vmatpush1.msra.mxu0 0.0
      %1209 = vmatprep.subr.mxu0 0.0
      %1210 = vmatpush1.msra.mxu0 0.0
      %1211 = vmatprep.subr.mxu0 0.0
      %1212 = vmatpush1.msra.mxu0 0.0
      %1213 = vmatprep.subr.mxu0 0.0
      %1214 = vmatpush1.msra.mxu0 0.0
      %1215 = vmatprep.subr.mxu0 0.0
      %1216 = vmatpush1.msra.mxu0 0.0
      %1217 = vmatprep.mubr.f32.mxu0 0.0
      %1218 = vmatmul.mubr.f32.gmra.mrb[0].mxu0 %v1151
      %v1219 = vpop.f32.mrb[0].mxu0
      %v1220 = vadd.f32 0.0, %v1219
      %v1221 = vpop.f32.mrb[0].mxu0
      %1222 = vdwg.mxu0
      %v1223 = vadd.f32 %v1149, %v1220
      %v1224 = vmul.f32 %v150, %v1223
      %v1225 = vadd.f32 %v1063, %v1224
      %v1226 = vmul.f32 %v1225, %v1225
      %v1227 = vadd.f32 %v1226, 1.0
      %v1228 = vrcp.pop %v1227
      %v1229 = vmul.f32 %v1226, %v1228
      %v1230 = vmul.f32 %v1225, -1.0
      %v1232 = vsel %vm52, %v1229, 0
      %1234 = vmatprep.subr.mxu0 0.0
      %1235 = vmatpush1.msra.mxu0 %v43
      %1236 = vmatprep.subr.mxu0 0.0
      %1237 = vmatpush1.msra.mxu0 %v44
      %1238 = vmatprep.subr.mxu0 0.0
      %1239 = vmatpush1.msra.mxu0 %v45
      %1240 = vmatprep.subr.mxu0 0.0
      %1241 = vmatpush1.msra.mxu0 %v46
      %1242 = vmatprep.subr.mxu0 0.0
      %1243 = vmatpush1.msra.mxu0 %v47
      %1244 = vmatprep.subr.mxu0 0.0
      %1245 = vmatpush1.msra.mxu0 %v48
      %1246 = vmatprep.subr.mxu0 0.0
      %1247 = vmatpush1.msra.mxu0 %v49
      %1248 = vmatprep.subr.mxu0 0.0
      %1249 = vmatpush1.msra.mxu0 %v50
      %1250 = vmatprep.subr.mxu0 0.0
      %1251 = vmatpush1.msra.mxu0 0.0
      %1252 = vmatprep.subr.mxu0 0.0
      %1253 = vmatpush1.msra.mxu0 0.0
      %1254 = vmatprep.subr.mxu0 0.0
      %1255 = vmatpush1.msra.mxu0 0.0
      %1256 = vmatprep.subr.mxu0 0.0
      %1257 = vmatpush1.msra.mxu0 0.0
      %1258 = vmatprep.subr.mxu0 0.0
      %1259 = vmatpush1.msra.mxu0 0.0
      %1260 = vmatprep.subr.mxu0 0.0
      %1261 = vmatpush1.msra.mxu0 0.0
      %1262 = vmatprep.subr.mxu0 0.0
      %1263 = vmatpush1.msra.mxu0 0.0
      %1264 = vmatprep.subr.mxu0 0.0
      %1265 = vmatpush1.msra.mxu0 0.0
      %1266 = vmatprep.subr.mxu0 0.0
      %1267 = vmatpush1.msra.mxu0 0.0
      %1268 = vmatprep.subr.mxu0 0.0
      %1269 = vmatpush1.msra.mxu0 0.0
      %1270 = vmatprep.subr.mxu0 0.0
      %1271 = vmatpush1.msra.mxu0 0.0
      %1272 = vmatprep.subr.mxu0 0.0
      %1273 = vmatpush1.msra.mxu0 0.0
      %1274 = vmatprep.subr.mxu0 0.0
      %1275 = vmatpush1.msra.mxu0 0.0
      %1276 = vmatprep.subr.mxu0 0.0
      %1277 = vmatpush1.msra.mxu0 0.0
      %1278 = vmatprep.subr.mxu0 0.0
      %1279 = vmatpush1.msra.mxu0 0.0
      %1280 = vmatprep.subr.mxu0 0.0
      %1281 = vmatpush1.msra.mxu0 0.0
      %1282 = vmatprep.subr.mxu0 0.0
      %1283 = vmatpush1.msra.mxu0 0.0
      %1284 = vmatprep.subr.mxu0 0.0
      %1285 = vmatpush1.msra.mxu0 0.0
      %1286 = vmatprep.subr.mxu0 0.0
      %1287 = vmatpush1.msra.mxu0 0.0
      %1288 = vmatprep.subr.mxu0 0.0
      %1289 = vmatpush1.msra.mxu0 0.0
      %1290 = vmatprep.subr.mxu0 0.0
      %1291 = vmatpush1.msra.mxu0 0.0
      %1292 = vmatprep.subr.mxu0 0.0
      %1293 = vmatpush1.msra.mxu0 0.0
      %1294 = vmatprep.subr.mxu0 0.0
      %1295 = vmatpush1.msra.mxu0 0.0
      %1296 = vmatprep.subr.mxu0 0.0
      %1297 = vmatpush1.msra.mxu0 0.0
      %1298 = vmatprep.mubr.f32.mxu0 0.0
      %1299 = vmatmul.mubr.f32.gmra.mrb[0].mxu0 %v1232
      %v1300 = vpop.f32.mrb[0].mxu0
      %v1301 = vadd.f32 0.0, %v1300
      %v1302 = vpop.f32.mrb[0].mxu0
      %1303 = vdwg.mxu0
      %v1304 = vadd.f32 %v1230, %v1301
      %v1305 = vmul.f32 %v313, %v1304
      %v1306 = vadd.f32 %v1063, %v1305
      %v1307 = vmul.f32 %v1306, %v1306
      %v1308 = vadd.f32 %v1307, 1.0
      %v1309 = vrcp.pop %v1308
      %v1310 = vmul.f32 %v1307, %v1309
      %v1311 = vmul.f32 %v1306, -1.0
      %v1313 = vsel %vm52, %v1310, 0
      %1315 = vmatprep.subr.mxu0 0.0
      %1316 = vmatpush1.msra.mxu0 %v43
      %1317 = vmatprep.subr.mxu0 0.0
      %1318 = vmatpush1.msra.mxu0 %v44
      %1319 = vmatprep.subr.mxu0 0.0
      %1320 = vmatpush1.msra.mxu0 %v45
      %1321 = vmatprep.subr.mxu0 0.0
      %1322 = vmatpush1.msra.mxu0 %v46
      %1323 = vmatprep.subr.mxu0 0.0
      %1324 = vmatpush1.msra.mxu0 %v47
      %1325 = vmatprep.subr.mxu0 0.0
      %1326 = vmatpush1.msra.mxu0 %v48
      %1327 = vmatprep.subr.mxu0 0.0
      %1328 = vmatpush1.msra.mxu0 %v49
      %1329 = vmatprep.subr.mxu0 0.0
      %1330 = vmatpush1.msra.mxu0 %v50
      %1331 = vmatprep.subr.mxu0 0.0
      %1332 = vmatpush1.msra.mxu0 0.0
      %1333 = vmatprep.subr.mxu0 0.0
      %1334 = vmatpush1.msra.mxu0 0.0
      %1335 = vmatprep.subr.mxu0 0.0
      %1336 = vmatpush1.msra.mxu0 0.0
      %1337 = vmatprep.subr.mxu0 0.0
      %1338 = vmatpush1.msra.mxu0 0.0
      %1339 = vmatprep.subr.mxu0 0.0
      %1340 = vmatpush1.msra.mxu0 0.0
      %1341 = vmatprep.subr.mxu0 0.0
      %1342 = vmatpush1.msra.mxu0 0.0
      %1343 = vmatprep.subr.mxu0 0.0
      %1344 = vmatpush1.msra.mxu0 0.0
      %1345 = vmatprep.subr.mxu0 0.0
      %1346 = vmatpush1.msra.mxu0 0.0
      %1347 = vmatprep.subr.mxu0 0.0
      %1348 = vmatpush1.msra.mxu0 0.0
      %1349 = vmatprep.subr.mxu0 0.0
      %1350 = vmatpush1.msra.mxu0 0.0
      %1351 = vmatprep.subr.mxu0 0.0
      %1352 = vmatpush1.msra.mxu0 0.0
      %1353 = vmatprep.subr.mxu0 0.0
      %1354 = vmatpush1.msra.mxu0 0.0
      %1355 = vmatprep.subr.mxu0 0.0
      %1356 = vmatpush1.msra.mxu0 0.0
      %1357 = vmatprep.subr.mxu0 0.0
      %1358 = vmatpush1.msra.mxu0 0.0
      %1359 = vmatprep.subr.mxu0 0.0
      %1360 = vmatpush1.msra.mxu0 0.0
      %1361 = vmatprep.subr.mxu0 0.0
      %1362 = vmatpush1.msra.mxu0 0.0
      %1363 = vmatprep.subr.mxu0 0.0
      %1364 = vmatpush1.msra.mxu0 0.0
      %1365 = vmatprep.subr.mxu0 0.0
      %1366 = vmatpush1.msra.mxu0 0.0
      %1367 = vmatprep.subr.mxu0 0.0
      %1368 = vmatpush1.msra.mxu0 0.0
      %1369 = vmatprep.subr.mxu0 0.0
      %1370 = vmatpush1.msra.mxu0 0.0
      %1371 = vmatprep.subr.mxu0 0.0
      %1372 = vmatpush1.msra.mxu0 0.0
      %1373 = vmatprep.subr.mxu0 0.0
      %1374 = vmatpush1.msra.mxu0 0.0
      %1375 = vmatprep.subr.mxu0 0.0
      %1376 = vmatpush1.msra.mxu0 0.0
      %1377 = vmatprep.subr.mxu0 0.0
      %1378 = vmatpush1.msra.mxu0 0.0
      %1379 = vmatprep.mubr.f32.mxu0 0.0
      %1380 = vmatmul.mubr.f32.gmra.mrb[0].mxu0 %v1313
      %v1381 = vpop.f32.mrb[0].mxu0
      %v1382 = vadd.f32 0.0, %v1381
      %v1383 = vpop.f32.mrb[0].mxu0
      %1384 = vdwg.mxu0
      %v1385 = vadd.f32 %v1311, %v1382
      %v1386 = vmul.f32 %v1223, 2.0
      %v1387 = vadd.f32 %v1142, %v1386
      %v1388 = vmul.f32 %v1304, 2.0
      %v1389 = vadd.f32 %v1387, %v1388
      %v1390 = vadd.f32 %v1389, %v1385
      %v1391 = vmul.f32 %v403, %v1390
      %v1392 = vadd.f32 %v1063, %v1391
      %1393 = vst.msk [vmem:[#allocation2] sm:$0xff] %vm52, %v1392
      %s1394 = smul.u32 %s62, 8
      %s1395 = scalar_lea.vmem [#allocation10], %s1394
      %1396 = vst.msk [vmem:[%s1395] sm:$0xff] %vm52, %v1392
    $region22: #{tpu_custom_call.1} parent=1 // loop_footer
      %s61 = sadd.s32 1, %s57
    $region23: #{tpu_custom_call.1} parent=1 // loop_footer_branch
      %56 = sbr.rel target = $region19
    $region24: #{tpu_custom_call.1} parent=1 // loop_exit
      _
    // Predicated region
    $region25: #{tpu_custom_call.1} parent=1 // pred_check
      _
    $region26: #{tpu_custom_call.1} parent=1 // pred_check_branch
      %1398 = sbr.rel (0) target = $region28
    $region27: #{tpu_custom_call.1} parent=1 // pred_region
      %s1400 = ssub.s32 1024, 1024
      %1401 = vsyncadd [#allocation7], %s1400
      %s1402 = sshll.u32 [#allocation10], 4
      %s1403 = int_to_ptr.vmem [resolvable:$true] %s1402
      %1408 = dma.vmem_to_hbm [thread:$0]  %s1403, 1024, %s3, [#allocation7], 128, 128, 8
    $region28: #{tpu_custom_call.1} parent=1 // pred_fallthru
      _
    // Predicated region
    $region29: #{tpu_custom_call.1} parent=1 // pred_check
      _
    $region30: #{tpu_custom_call.1} parent=1 // pred_check_branch
      %1410 = sbr.rel (0) target = $region32
    $region31: #{tpu_custom_call.1} parent=1 // pred_region
      %1411 = dma.done [#allocation7], 1024
    $region32: #{tpu_custom_call.1} parent=1 // pred_fallthru
      _
    %1412 = vsyncpa [#allocation6], 1
    %1413 = vsyncpa [#allocation9], 1
    %1414 = vsyncpa [#allocation7], 1

</llo_original>
